<compile_context>
chip_gen: v7x
topology: tpu7x:2x2x1
jax: 0.10.0
libtpu: 0.0.40
codegen_flags: <defaults>
</compile_context>

<pallas_src>
import numpy as np

import jax
import jax.numpy as jnp
from jax.experimental import pallas as pl
from jax.experimental.pallas import tpu as pltpu

EPS = 1e-5  # PyTorch InstanceNorm2d default


# ----------------------------------------------------------------------------
# Fused (pool / upsample+concat) -> Conv3x3+IN+ReLU -> Conv3x3+IN+ReLU kernel
# ----------------------------------------------------------------------------
def _make_dc_kernel(*, H, W, P, Ca, Cb, Cmid, Cout, mode):
    """Builds the fused DoubleConv kernel body for one configuration.

    mode = 'plain' : input A is (1, Ca, H*(W+P)) at the conv level.
           'pool'  : input A is (1, Ca, 2H, 2(W+P)); 2x2 max-pooled in VMEM.
           'up'    : input A is (1, Ca, H//2, (W+P)//2); nearest-2x upsampled in VMEM.
    Optional input B (skip connection) is concatenated after A's channels in VMEM.
    """
    Wr = W + P                 # padded row width at the conv level
    L = H * Wr                 # canonical flat length at the conv level
    Ctot = Ca + Cb
    inv_n = 1.0 / float(H * W)

    def kernel(*refs):
        it = iter(refs)
        xa_ref = next(it)
        se_ref = so_ref = up_ref = xb_ref = None
        if mode == "pool":
            se_ref = next(it)
            so_ref = next(it)
        elif mode == "up":
            up_ref = next(it)
        if Cb > 0:
            xb_ref = next(it)
        m_ref = next(it)
        w1_ref = next(it)
        w2_ref = next(it)
        o_ref = next(it)
        pad1 = next(it)        # VMEM (Ctot, Lfull) f32 : zero-padded conv1 input
        pad2 = next(it)        # VMEM (Cmid, Lfull) f32 : zero-padded conv2 input

        mask = m_ref[...]      # (1, L) f32: 1 on data columns, 0 on the P pad columns

        # ---- stage input(s) into the zero-padded conv layout held in VMEM ----
        pad1[...] = jnp.zeros(pad1.shape, pad1.dtype)
        if mode == "plain":
            pad1[pl.ds(0, Ca), pl.ds(Wr + 1, L)] = xa_ref[0]
        elif mode == "pool":
            se = se_ref[...]                               # (2*Wr, Wr) bf16 even-col selector
            so = so_ref[...]                               # (2*Wr, Wr) bf16 odd-col selector
            for h in range(H):                             # pooled output rows
                r0 = xa_ref[0, :, 2 * h, :]
                r1 = xa_ref[0, :, 2 * h + 1, :]
                v = jnp.maximum(r0, r1).astype(jnp.bfloat16)
                row = jnp.maximum(
                    jnp.dot(v, se, preferred_element_type=jnp.float32),
                    jnp.dot(v, so, preferred_element_type=jnp.float32))
                pad1[pl.ds(0, Ca), pl.ds((h + 1) * Wr + 1, Wr)] = row
        else:  # "up": nearest-neighbour 2x upsample
            d = up_ref[...]                                # (Wr//2, Wr) bf16 duplication matrix
            for h in range(H):
                src = xa_ref[0, :, h // 2, :].astype(jnp.bfloat16)
                row = jnp.dot(src, d, preferred_element_type=jnp.float32)
                pad1[pl.ds(0, Ca), pl.ds((h + 1) * Wr + 1, Wr)] = row
        if Cb > 0:  # skip connection concatenated along channels, directly in VMEM
            pad1[pl.ds(Ca, Cb), pl.ds(Wr + 1, L)] = xb_ref[0]

        # ---- Conv3x3 as 9 shift-offset MXU dots (bf16 operands, f32 accumulation) ----
        def conv3x3(src_ref, w_ref, cout):
            acc = jnp.zeros((cout, L), jnp.float32)
            for kh in range(3):
                for kw in range(3):
                    tap = src_ref[:, pl.ds(kh * Wr + kw, L)]
                    acc = acc + jnp.dot(w_ref[kh * 3 + kw],
                                        tap.astype(jnp.bfloat16),
                                        preferred_element_type=jnp.float32)
            return acc

        # ---- InstanceNorm (single-pass masked sum / sumsq) + ReLU ----
        def inst_norm_relu(acc):
            am = acc * mask
            s = jnp.sum(am, axis=1, keepdims=True)
            ss = jnp.sum(am * acc, axis=1, keepdims=True)
            mean = s * inv_n
            var = jnp.maximum(ss * inv_n - mean * mean, 0.0)
            y = (acc - mean) * jax.lax.rsqrt(var + EPS)
            return jnp.maximum(y, 0.0) * mask              # keep pad columns at zero

        h1 = inst_norm_relu(conv3x3(pad1, w1_ref, Cmid))
        pad2[...] = jnp.zeros(pad2.shape, pad2.dtype)
        pad2[:, pl.ds(Wr + 1, L)] = h1

        out = inst_norm_relu(conv3x3(pad2, w2_ref, Cout))
        o_ref[0] = out.astype(o_ref.dtype)                 # lane-dense (Cout, H*(W+P)) store

    return kernel


def fused_double_conv(x_a, w1, w2, mask, *, H, W, P, mode="plain",
                      comp_even=None, comp_odd=None, up_mat=None, x_skip=None):
    """One pallas_call per UNet DoubleConv block (optionally fused pool / upsample+concat)."""
    N = x_a.shape[0]
    Ca = x_a.shape[1]
    Cb = 0 if x_skip is None else x_skip.shape[1]
    Cmid = w1.shape[1]
    Cout = w2.shape[1]
    assert w1.shape[2] == Ca + Cb and w2.shape[2] == Cmid
    Wr = W + P
    L = H * Wr
    Lfull = (H + 2) * Wr + 2   # zero-padded conv input length (covers all 9 tap offsets)

    kernel = _make_dc_kernel(H=H, W=W, P=P, Ca=Ca, Cb=Cb,
                             Cmid=Cmid, Cout=Cout, mode=mode)

    inputs = [x_a]
    if mode == "plain":
        in_specs = [pl.BlockSpec((1, Ca, L), lambda n: (n, 0, 0))]
    else:
        Hin, Win = x_a.shape[2], x_a.shape[3]
        in_specs = [pl.BlockSpec((1, Ca, Hin, Win), lambda n: (n, 0, 0, 0))]
    if mode == "pool":
        inputs += [comp_even, comp_odd]
        in_specs += [pl.BlockSpec(comp_even.shape, lambda n: (0, 0)),
                     pl.BlockSpec(comp_odd.shape, lambda n: (0, 0))]
    elif mode == "up":
        inputs.append(up_mat)
        in_specs.append(pl.BlockSpec(up_mat.shape, lambda n: (0, 0)))
    if Cb > 0:
        inputs.append(x_skip)
        in_specs.append(pl.BlockSpec((1, Cb, L), lambda n: (n, 0, 0)))
    inputs += [mask, w1, w2]
    in_specs += [pl.BlockSpec((1, L), lambda n: (0, 0)),
                 pl.BlockSpec(w1.shape, lambda n: (0, 0, 0)),
                 pl.BlockSpec(w2.shape, lambda n: (0, 0, 0))]

    return pl.pallas_call(
        kernel,
        out_shape=jax.ShapeDtypeStruct((N, Cout, L), jnp.float32),
        grid=(N,),
        in_specs=in_specs,
        out_specs=pl.BlockSpec((1, Cout, L), lambda n: (n, 0, 0)),
        scratch_shapes=[pltpu.VMEM((Ca + Cb, Lfull), jnp.float32),
                        pltpu.VMEM((Cmid, Lfull), jnp.float32)],
        compiler_params=pltpu.CompilerParams(dimension_semantics=("parallel",)),
    )(*inputs)


# ----------------------------------------------------------------------------
# Final 1x1 conv + bias
# ----------------------------------------------------------------------------
def _conv1x1_kernel(x_ref, w_ref, b_ref, o_ref):
    x = x_ref[0].astype(jnp.bfloat16)                       # (Cin, L)
    y = jnp.dot(w_ref[...], x, preferred_element_type=jnp.float32)
    o_ref[0] = (y + b_ref[...]).astype(o_ref.dtype)


def conv1x1_bias(x, w, b):
    """x: (N, Cin, L) canonical; w: (Cout, Cin) bf16; b: (Cout, 1) f32."""
    N, Cin, L = x.shape
    Cout = w.shape[0]
    return pl.pallas_call(
        _conv1x1_kernel,
        out_shape=jax.ShapeDtypeStruct((N, Cout, L), jnp.float32),
        grid=(N,),
        in_specs=[pl.BlockSpec((1, Cin, L), lambda n: (n, 0, 0)),
                  pl.BlockSpec((Cout, Cin), lambda n: (0, 0)),
                  pl.BlockSpec((Cout, 1), lambda n: (0, 0))],
        out_specs=pl.BlockSpec((1, Cout, L), lambda n: (n, 0, 0)),
        compiler_params=pltpu.CompilerParams(dimension_semantics=("parallel",)),
    )(x, w, b)


# ----------------------------------------------------------------------------
# Host-side constants (masks, tiny 0/1 selection matrices) and layout glue
# ----------------------------------------------------------------------------
def _row_mask(H, W, P):
    m = np.zeros((H, W + P), np.float32)
    m[:, :W] = 1.0
    return jnp.asarray(m.reshape(1, H * (W + P)))


def _compaction_mats(W_out, Wr_out, Wr_in):
    """0/1 matrices selecting even / odd data columns (horizontal half of 2x2 maxpool)."""
    se = np.zeros((Wr_in, Wr_out), np.float32)
    so = np.zeros((Wr_in, Wr_out), np.float32)
    for w in range(W_out):
        se[2 * w, w] = 1.0
        so[2 * w + 1, w] = 1.0
    return jnp.asarray(se, jnp.bfloat16), jnp.asarray(so, jnp.bfloat16)


def _upsample_mat(W_out, Wr_out, Wr_in):
    """0/1 matrix duplicating each low-res column twice (nearest-2x, horizontal part)."""
    d = np.zeros((Wr_in, Wr_out), np.float32)
    for w in range(W_out):
        d[w // 2, w] = 1.0
    return jnp.asarray(d, jnp.bfloat16)


def build_consts(H, W):
    assert H % 4 == 0 and W % 4 == 0, "spatial size must be divisible by 4 (2 pooling levels)"
    P0 = 8                      # pad columns at full res (halves per level; >=2 at deepest level)
    lv = []
    h, w, p = H, W, P0
    for _ in range(3):
        lv.append(dict(H=h, W=w, P=p, Wr=w + p, L=h * (w + p)))
        h, w, p = h // 2, w // 2, p // 2
    c = {"lv": lv}
    c["mask0"] = _row_mask(lv[0]["H"], lv[0]["W"], lv[0]["P"])
    c["mask1"] = _row_mask(lv[1]["H"], lv[1]["W"], lv[1]["P"])
    c["mask2"] = _row_mask(lv[2]["H"], lv[2]["W"], lv[2]["P"])
    c["se01"], c["so01"] = _compaction_mats(lv[1]["W"], lv[1]["Wr"], lv[0]["Wr"])
    c["se12"], c["so12"] = _compaction_mats(lv[2]["W"], lv[2]["Wr"], lv[1]["Wr"])
    c["d21"] = _upsample_mat(lv[1]["W"], lv[1]["Wr"], lv[2]["Wr"])
    c["d10"] = _upsample_mat(lv[0]["W"], lv[0]["Wr"], lv[1]["Wr"])
    return c


def to_canonical(x_nchw, P):
    N, C, H, W = x_nchw.shape
    xp = jnp.pad(x_nchw, ((0, 0), (0, 0), (0, 0), (0, P)))
    return xp.reshape(N, C, H * (W + P))


def from_canonical(x, H, W, P):
    N, C, _ = x.shape
    return x.reshape(N, C, H, W + P)[:, :, :, :W]


# ----------------------------------------------------------------------------
# UNet (norm_net) parameters and forward
# ----------------------------------------------------------------------------
def init_unet_params(key, n_channels=3, c0=8, c1=16, c2=32):
    # Conv weights stored as (tap=kh*3+kw, Cout, Cin) in bf16
    # (PyTorch (Cout,Cin,kh,kw) would map via transpose to this layout).
    def conv_w(k, cout, cin):
        scale = (2.0 / (9.0 * cin)) ** 0.5
        return (jax.random.normal(k, (9, cout, cin), jnp.float32) * scale).astype(jnp.bfloat16)

    keys = jax.random.split(key, 11)
    return {
        "inc_w1":   conv_w(keys[0], c0, n_channels),
        "inc_w2":   conv_w(keys[1], c0, c0),
        "down1_w1": conv_w(keys[2], c1, c0),
        "down1_w2": conv_w(keys[3], c1, c1),
        "down2_w1": conv_w(keys[4], c2, c1),
        "down2_w2": conv_w(keys[5], c2, c2),
        "up1_w1":   conv_w(keys[6], c1, c2 + c1),
        "up1_w2":   conv_w(keys[7], c1, c1),
        "up2_w1":   conv_w(keys[8], c0, c1 + c0),
        "up2_w2":   conv_w(keys[9], c0, c0),
        "outc_w":   (jax.random.normal(keys[10], (n_channels, c0), jnp.float32)
                     * (1.0 / c0) ** 0.5).astype(jnp.bfloat16),
        "outc_b":   jnp.zeros((n_channels, 1), jnp.float32),
    }


def unet_forward(params, consts, x_can):
    lv0, lv1, lv2 = consts["lv"]
    N = x_can.shape[0]

    # inc (level 0)
    x1 = fused_double_conv(x_can, params["inc_w1"], params["inc_w2"], consts["mask0"],
                           H=lv0["H"], W=lv0["W"], P=lv0["P"], mode="plain")
    # down1: fused 2x2 maxpool + DoubleConv (level 1)
    x1_4d = x1.reshape(N, x1.shape[1], lv0["H"], lv0["Wr"])
    x2 = fused_double_conv(x1_4d, params["down1_w1"], params["down1_w2"], consts["mask1"],
                           H=lv1["H"], W=lv1["W"], P=lv1["P"], mode="pool",
                           comp_even=consts["se01"], comp_odd=consts["so01"])
    # down2: fused 2x2 maxpool + DoubleConv (level 2)
    x2_4d = x2.reshape(N, x2.shape[1], lv1["H"], lv1["Wr"])
    x3 = fused_double_conv(x2_4d, params["down2_w1"], params["down2_w2"], consts["mask2"],
                           H=lv2["H"], W=lv2["W"], P=lv2["P"], mode="pool",
                           comp_even=consts["se12"], comp_odd=consts["so12"])
    # up1: fused nearest-2x upsample + skip concat + DoubleConv (level 1)
    x3_4d = x3.reshape(N, x3.shape[1], lv2["H"], lv2["Wr"])
    u1 = fused_double_conv(x3_4d, params["up1_w1"], params["up1_w2"], consts["mask1"],
                           H=lv1["H"], W=lv1["W"], P=lv1["P"], mode="up",
                           up_mat=consts["d21"], x_skip=x2)
    # up2: fused nearest-2x upsample + skip concat + DoubleConv (level 0)
    u1_4d = u1.reshape(N, u1.shape[1], lv1["H"], lv1["Wr"])
    u2 = fused_double_conv(u1_4d, params["up2_w1"], params["up2_w2"], consts["mask0"],
                           H=lv0["H"], W=lv0["W"], P=lv0["P"], mode="up",
                           up_mat=consts["d10"], x_skip=x1)
    # output 1x1 conv + bias
    return conv1x1_bias(u2, params["outc_w"], params["outc_b"])


# ----------------------------------------------------------------------------
# Relighting wrapper (forward pass of the PyTorch module)
# ----------------------------------------------------------------------------
class Relighting:
    """JAX/Pallas port of relighting/src/Relighting.py (forward pass only)."""

    def __init__(self, task="normalization", key=None):
        if task != "normalization":
            # TODO(synk): relighting_model.RelightingNet is not available; only the
            # 'normalization' task path is implemented.
            raise NotImplementedError(
                f"task={task!r} requires RelightingNet, which is not provided")
        self.task = task
        key = jax.random.PRNGKey(0) if key is None else key
        self.norm_params = init_unet_params(key, n_channels=3)

    def __call__(self, x_nchw, t=None):
        # PyTorch convention: NCHW in, NCHW out.
        x = jnp.asarray(x_nchw, jnp.float32)
        N, C, H, W = x.shape
        consts = build_consts(H, W)
        P0 = consts["lv"][0]["P"]
        x_can = to_canonical(x, P0)
        out_can = unet_forward(self.norm_params, consts, x_can)
        return from_canonical(out_can, H, W, P0)


# ----------------------------------------------------------------------------
if __name__ == "__main__":
    key = jax.random.PRNGKey(0)
    k_x, k_p = jax.random.split(key)
    # PyTorch-style NCHW input: batch=2, channels=3 (n_channels=3 in the module), spatial 16x16
    x = jax.random.normal(k_x, (2, 3, 16, 16), jnp.float32)

    model = Relighting(task="normalization", key=k_p)
    out = model(x)
    out = jax.block_until_ready(out)

    assert out.shape == (2, 3, 16, 16), out.shape
    assert out.dtype == jnp.float32
    assert bool(jnp.all(jnp.isfinite(out)))
    print("KERNEL_OK")
</pallas_src>

<mosaic_0001>
module attributes {stable_mosaic.version = 11 : i64} {
  func.func @kernel(%arg0: i32, %arg1: memref<1x3x384xf32, #tpu.memory_space<vmem>>, %arg2: memref<1x384xf32, #tpu.memory_space<vmem>>, %arg3: memref<9x8x3xbf16, #tpu.memory_space<vmem>>, %arg4: memref<9x8x8xbf16, #tpu.memory_space<vmem>>, %arg5: memref<1x8x384xf32, #tpu.memory_space<vmem>>, %arg6: memref<3x434xf32, #tpu.memory_space<vmem>>, %arg7: memref<8x434xf32, #tpu.memory_space<vmem>>) attributes {dimension_semantics = [#tpu.dimension_semantics<parallel>], iteration_bounds = array<i64: 2>, scalar_prefetch = 0 : i64, scratch_operands = 2 : i64, tpu.core_type = #tpu.core_type<tc>, window_params = [{transform_indices = @transform_0, window_bounds = array<i64: 1, 3, 384>}, {pipeline_mode = #tpu.pipeline_mode<synchronous>, transform_indices = @transform_1, window_bounds = array<i64: 1, 384>}, {pipeline_mode = #tpu.pipeline_mode<synchronous>, transform_indices = @transform_2, window_bounds = array<i64: 9, 8, 3>}, {pipeline_mode = #tpu.pipeline_mode<synchronous>, transform_indices = @transform_3, window_bounds = array<i64: 9, 8, 8>}, {transform_indices = @transform_4, window_bounds = array<i64: 1, 8, 384>}]} {
    %c0 = arith.constant 0 : index
    %c0_0 = arith.constant 0 : index
    %0 = vector.load %arg2[%c0, %c0_0] : memref<1x384xf32, #tpu.memory_space<vmem>>, vector<1x384xf32>
    %cst = arith.constant 0.000000e+00 : f32
    %1 = vector.broadcast %cst : f32 to vector<3x434xf32>
    %c0_1 = arith.constant 0 : index
    %c0_2 = arith.constant 0 : index
    %2 = vector.load %arg6[%c0_1, %c0_2] : memref<3x434xf32, #tpu.memory_space<vmem>>, vector<3x434xf32>
    tpu.vector_store %arg6[%c0_1, %c0_2], %1 {strides = array<i32>} : memref<3x434xf32, #tpu.memory_space<vmem>>, vector<3x434xf32>,
    %c0_3 = arith.constant 0 : index
    %c0_4 = arith.constant 0 : index
    %c0_5 = arith.constant 0 : index
    %3 = vector.load %arg1[%c0_3, %c0_4, %c0_5] : memref<1x3x384xf32, #tpu.memory_space<vmem>>, vector<1x3x384xf32>
    %4 = vector.shape_cast %3 : vector<1x3x384xf32> to vector<3x384xf32>
    %c0_6 = arith.constant 0 : index
    %c25 = arith.constant 25 : index
    %5 = vector.load %arg6[%c0_6, %c25] : memref<3x434xf32, #tpu.memory_space<vmem>>, vector<3x384xf32>
    tpu.vector_store %arg6[%c0_6, %c25], %4 {strides = array<i32>} : memref<3x434xf32, #tpu.memory_space<vmem>>, vector<3x384xf32>,
    %cst_7 = arith.constant 0.000000e+00 : f32
    %6 = vector.broadcast %cst_7 : f32 to vector<8x384xf32>
    %c0_8 = arith.constant 0 : index
    %c0_9 = arith.constant 0 : index
    %7 = vector.load %arg6[%c0_8, %c0_9] : memref<3x434xf32, #tpu.memory_space<vmem>>, vector<3x384xf32>
    %c0_10 = arith.constant 0 : index
    %c0_11 = arith.constant 0 : index
    %c0_12 = arith.constant 0 : index
    %8 = vector.load %arg3[%c0_10, %c0_11, %c0_12] : memref<9x8x3xbf16, #tpu.memory_space<vmem>>, vector<1x8x3xbf16>
    %9 = vector.shape_cast %8 : vector<1x8x3xbf16> to vector<8x3xbf16>
    %10 = arith.truncf %7 : vector<3x384xf32> to vector<3x384xbf16>
    %cst_13 = arith.constant dense<0.000000e+00> : vector<8x384xf32>
    %11 = tpu.matmul %9, %10, %cst_13 {dimension_numbers = #tpu.dot_dimension_numbers<[1], [0], [0], [1], [0, 0, 1, 1], [], []>} : vector<8x3xbf16>, vector<3x384xbf16>, vector<8x384xf32> -> vector<8x384xf32>
    %12 = arith.addf %6, %11 : vector<8x384xf32>
    %c0_14 = arith.constant 0 : index
    %c1 = arith.constant 1 : index
    %13 = vector.load %arg6[%c0_14, %c1] : memref<3x434xf32, #tpu.memory_space<vmem>>, vector<3x384xf32>
    %c1_15 = arith.constant 1 : index
    %c0_16 = arith.constant 0 : index
    %c0_17 = arith.constant 0 : index
    %14 = vector.load %arg3[%c1_15, %c0_16, %c0_17] : memref<9x8x3xbf16, #tpu.memory_space<vmem>>, vector<1x8x3xbf16>
    %15 = vector.shape_cast %14 : vector<1x8x3xbf16> to vector<8x3xbf16>
    %16 = arith.truncf %13 : vector<3x384xf32> to vector<3x384xbf16>
    %cst_18 = arith.constant dense<0.000000e+00> : vector<8x384xf32>
    %17 = tpu.matmul %15, %16, %cst_18 {dimension_numbers = #tpu.dot_dimension_numbers<[1], [0], [0], [1], [0, 0, 1, 1], [], []>} : vector<8x3xbf16>, vector<3x384xbf16>, vector<8x384xf32> -> vector<8x384xf32>
    %18 = arith.addf %12, %17 : vector<8x384xf32>
    %c0_19 = arith.constant 0 : index
    %c2 = arith.constant 2 : index
    %19 = vector.load %arg6[%c0_19, %c2] : memref<3x434xf32, #tpu.memory_space<vmem>>, vector<3x384xf32>
    %c2_20 = arith.constant 2 : index
    %c0_21 = arith.constant 0 : index
    %c0_22 = arith.constant 0 : index
    %20 = vector.load %arg3[%c2_20, %c0_21, %c0_22] : memref<9x8x3xbf16, #tpu.memory_space<vmem>>, vector<1x8x3xbf16>
    %21 = vector.shape_cast %20 : vector<1x8x3xbf16> to vector<8x3xbf16>
    %22 = arith.truncf %19 : vector<3x384xf32> to vector<3x384xbf16>
    %cst_23 = arith.constant dense<0.000000e+00> : vector<8x384xf32>
    %23 = tpu.matmul %21, %22, %cst_23 {dimension_numbers = #tpu.dot_dimension_numbers<[1], [0], [0], [1], [0, 0, 1, 1], [], []>} : vector<8x3xbf16>, vector<3x384xbf16>, vector<8x384xf32> -> vector<8x384xf32>
    %24 = arith.addf %18, %23 : vector<8x384xf32>
    %c0_24 = arith.constant 0 : index
    %c24 = arith.constant 24 : index
    %25 = vector.load %arg6[%c0_24, %c24] : memref<3x434xf32, #tpu.memory_space<vmem>>, vector<3x384xf32>
    %c3 = arith.constant 3 : index
    %c0_25 = arith.constant 0 : index
    %c0_26 = arith.constant 0 : index
    %26 = vector.load %arg3[%c3, %c0_25, %c0_26] : memref<9x8x3xbf16, #tpu.memory_space<vmem>>, vector<1x8x3xbf16>
    %27 = vector.shape_cast %26 : vector<1x8x3xbf16> to vector<8x3xbf16>
    %28 = arith.truncf %25 : vector<3x384xf32> to vector<3x384xbf16>
    %cst_27 = arith.constant dense<0.000000e+00> : vector<8x384xf32>
    %29 = tpu.matmul %27, %28, %cst_27 {dimension_numbers = #tpu.dot_dimension_numbers<[1], [0], [0], [1], [0, 0, 1, 1], [], []>} : vector<8x3xbf16>, vector<3x384xbf16>, vector<8x384xf32> -> vector<8x384xf32>
    %30 = arith.addf %24, %29 : vector<8x384xf32>
    %c0_28 = arith.constant 0 : index
    %c25_29 = arith.constant 25 : index
    %31 = vector.load %arg6[%c0_28, %c25_29] : memref<3x434xf32, #tpu.memory_space<vmem>>, vector<3x384xf32>
    %c4 = arith.constant 4 : index
    %c0_30 = arith.constant 0 : index
    %c0_31 = arith.constant 0 : index
    %32 = vector.load %arg3[%c4, %c0_30, %c0_31] : memref<9x8x3xbf16, #tpu.memory_space<vmem>>, vector<1x8x3xbf16>
    %33 = vector.shape_cast %32 : vector<1x8x3xbf16> to vector<8x3xbf16>
    %34 = arith.truncf %31 : vector<3x384xf32> to vector<3x384xbf16>
    %cst_32 = arith.constant dense<0.000000e+00> : vector<8x384xf32>
    %35 = tpu.matmul %33, %34, %cst_32 {dimension_numbers = #tpu.dot_dimension_numbers<[1], [0], [0], [1], [0, 0, 1, 1], [], []>} : vector<8x3xbf16>, vector<3x384xbf16>, vector<8x384xf32> -> vector<8x384xf32>
    %36 = arith.addf %30, %35 : vector<8x384xf32>
    %c0_33 = arith.constant 0 : index
    %c26 = arith.constant 26 : index
    %37 = vector.load %arg6[%c0_33, %c26] : memref<3x434xf32, #tpu.memory_space<vmem>>, vector<3x384xf32>
    %c5 = arith.constant 5 : index
    %c0_34 = arith.constant 0 : index
    %c0_35 = arith.constant 0 : index
    %38 = vector.load %arg3[%c5, %c0_34, %c0_35] : memref<9x8x3xbf16, #tpu.memory_space<vmem>>, vector<1x8x3xbf16>
    %39 = vector.shape_cast %38 : vector<1x8x3xbf16> to vector<8x3xbf16>
    %40 = arith.truncf %37 : vector<3x384xf32> to vector<3x384xbf16>
    %cst_36 = arith.constant dense<0.000000e+00> : vector<8x384xf32>
    %41 = tpu.matmul %39, %40, %cst_36 {dimension_numbers = #tpu.dot_dimension_numbers<[1], [0], [0], [1], [0, 0, 1, 1], [], []>} : vector<8x3xbf16>, vector<3x384xbf16>, vector<8x384xf32> -> vector<8x384xf32>
    %42 = arith.addf %36, %41 : vector<8x384xf32>
    %c0_37 = arith.constant 0 : index
    %c48 = arith.constant 48 : index
    %43 = vector.load %arg6[%c0_37, %c48] : memref<3x434xf32, #tpu.memory_space<vmem>>, vector<3x384xf32>
    %c6 = arith.constant 6 : index
    %c0_38 = arith.constant 0 : index
    %c0_39 = arith.constant 0 : index
    %44 = vector.load %arg3[%c6, %c0_38, %c0_39] : memref<9x8x3xbf16, #tpu.memory_space<vmem>>, vector<1x8x3xbf16>
    %45 = vector.shape_cast %44 : vector<1x8x3xbf16> to vector<8x3xbf16>
    %46 = arith.truncf %43 : vector<3x384xf32> to vector<3x384xbf16>
    %cst_40 = arith.constant dense<0.000000e+00> : vector<8x384xf32>
    %47 = tpu.matmul %45, %46, %cst_40 {dimension_numbers = #tpu.dot_dimension_numbers<[1], [0], [0], [1], [0, 0, 1, 1], [], []>} : vector<8x3xbf16>, vector<3x384xbf16>, vector<8x384xf32> -> vector<8x384xf32>
    %48 = arith.addf %42, %47 : vector<8x384xf32>
    %c0_41 = arith.constant 0 : index
    %c49 = arith.constant 49 : index
    %49 = vector.load %arg6[%c0_41, %c49] : memref<3x434xf32, #tpu.memory_space<vmem>>, vector<3x384xf32>
    %c7 = arith.constant 7 : index
    %c0_42 = arith.constant 0 : index
    %c0_43 = arith.constant 0 : index
    %50 = vector.load %arg3[%c7, %c0_42, %c0_43] : memref<9x8x3xbf16, #tpu.memory_space<vmem>>, vector<1x8x3xbf16>
    %51 = vector.shape_cast %50 : vector<1x8x3xbf16> to vector<8x3xbf16>
    %52 = arith.truncf %49 : vector<3x384xf32> to vector<3x384xbf16>
    %cst_44 = arith.constant dense<0.000000e+00> : vector<8x384xf32>
    %53 = tpu.matmul %51, %52, %cst_44 {dimension_numbers = #tpu.dot_dimension_numbers<[1], [0], [0], [1], [0, 0, 1, 1], [], []>} : vector<8x3xbf16>, vector<3x384xbf16>, vector<8x384xf32> -> vector<8x384xf32>
    %54 = arith.addf %48, %53 : vector<8x384xf32>
    %c0_45 = arith.constant 0 : index
    %c50 = arith.constant 50 : index
    %55 = vector.load %arg6[%c0_45, %c50] : memref<3x434xf32, #tpu.memory_space<vmem>>, vector<3x384xf32>
    %c8 = arith.constant 8 : index
    %c0_46 = arith.constant 0 : index
    %c0_47 = arith.constant 0 : index
    %56 = vector.load %arg3[%c8, %c0_46, %c0_47] : memref<9x8x3xbf16, #tpu.memory_space<vmem>>, vector<1x8x3xbf16>
    %57 = vector.shape_cast %56 : vector<1x8x3xbf16> to vector<8x3xbf16>
    %58 = arith.truncf %55 : vector<3x384xf32> to vector<3x384xbf16>
    %cst_48 = arith.constant dense<0.000000e+00> : vector<8x384xf32>
    %59 = tpu.matmul %57, %58, %cst_48 {dimension_numbers = #tpu.dot_dimension_numbers<[1], [0], [0], [1], [0, 0, 1, 1], [], []>} : vector<8x3xbf16>, vector<3x384xbf16>, vector<8x384xf32> -> vector<8x384xf32>
    %60 = arith.addf %54, %59 : vector<8x384xf32>
    %61 = vector.broadcast %0 : vector<1x384xf32> to vector<8x384xf32>
    %62 = arith.mulf %60, %61 : vector<8x384xf32>
    %cst_49 = arith.constant dense<0.000000e+00> : vector<8xf32>
    %63 = vector.multi_reduction <add>, %62, %cst_49 [1] : vector<8x384xf32> to vector<8xf32>
    %64 = vector.shape_cast %63 : vector<8xf32> to vector<8x1xf32>
    %65 = arith.mulf %62, %60 : vector<8x384xf32>
    %cst_50 = arith.constant dense<0.000000e+00> : vector<8xf32>
    %66 = vector.multi_reduction <add>, %65, %cst_50 [1] : vector<8x384xf32> to vector<8xf32>
    %67 = vector.shape_cast %66 : vector<8xf32> to vector<8x1xf32>
    %cst_51 = arith.constant 3.906250e-03 : f32
    %68 = vector.broadcast %cst_51 : f32 to vector<8x1xf32>
    %69 = arith.mulf %64, %68 : vector<8x1xf32>
    %cst_52 = arith.constant 3.906250e-03 : f32
    %70 = vector.broadcast %cst_52 : f32 to vector<8x1xf32>
    %71 = arith.mulf %67, %70 : vector<8x1xf32>
    %72 = arith.mulf %69, %69 : vector<8x1xf32>
    %73 = arith.subf %71, %72 : vector<8x1xf32>
    %cst_53 = arith.constant 0.000000e+00 : f32
    %74 = vector.broadcast %cst_53 : f32 to vector<8x1xf32>
    %75 = arith.maximumf %73, %74 : vector<8x1xf32>
    %76 = vector.broadcast %69 : vector<8x1xf32> to vector<8x384xf32>
    %77 = arith.subf %60, %76 : vector<8x384xf32>
    %cst_54 = arith.constant 9.99999974E-6 : f32
    %78 = vector.broadcast %cst_54 : f32 to vector<8x1xf32>
    %79 = arith.addf %75, %78 : vector<8x1xf32>
    %80 = math.rsqrt %79 : vector<8x1xf32>
    %81 = vector.broadcast %80 : vector<8x1xf32> to vector<8x384xf32>
    %82 = arith.mulf %77, %81 : vector<8x384xf32>
    %cst_55 = arith.constant 0.000000e+00 : f32
    %83 = vector.broadcast %cst_55 : f32 to vector<8x384xf32>
    %84 = arith.maximumf %82, %83 : vector<8x384xf32>
    %85 = vector.broadcast %0 : vector<1x384xf32> to vector<8x384xf32>
    %86 = arith.mulf %84, %85 : vector<8x384xf32>
    %cst_56 = arith.constant 0.000000e+00 : f32
    %87 = vector.broadcast %cst_56 : f32 to vector<8x434xf32>
    %c0_57 = arith.constant 0 : index
    %c0_58 = arith.constant 0 : index
    %88 = vector.load %arg7[%c0_57, %c0_58] : memref<8x434xf32, #tpu.memory_space<vmem>>, vector<8x434xf32>
    tpu.vector_store %arg7[%c0_57, %c0_58], %87 {strides = array<i32>} : memref<8x434xf32, #tpu.memory_space<vmem>>, vector<8x434xf32>,
    %c0_59 = arith.constant 0 : index
    %c25_60 = arith.constant 25 : index
    %89 = vector.load %arg7[%c0_59, %c25_60] : memref<8x434xf32, #tpu.memory_space<vmem>>, vector<8x384xf32>
    tpu.vector_store %arg7[%c0_59, %c25_60], %86 {strides = array<i32>} : memref<8x434xf32, #tpu.memory_space<vmem>>, vector<8x384xf32>,
    %cst_61 = arith.constant 0.000000e+00 : f32
    %90 = vector.broadcast %cst_61 : f32 to vector<8x384xf32>
    %c0_62 = arith.constant 0 : index
    %c0_63 = arith.constant 0 : index
    %91 = vector.load %arg7[%c0_62, %c0_63] : memref<8x434xf32, #tpu.memory_space<vmem>>, vector<8x384xf32>
    %c0_64 = arith.constant 0 : index
    %c0_65 = arith.constant 0 : index
    %c0_66 = arith.constant 0 : index
    %92 = vector.load %arg4[%c0_64, %c0_65, %c0_66] : memref<9x8x8xbf16, #tpu.memory_space<vmem>>, vector<1x8x8xbf16>
    %93 = vector.shape_cast %92 : vector<1x8x8xbf16> to vector<8x8xbf16>
    %94 = arith.truncf %91 : vector<8x384xf32> to vector<8x384xbf16>
    %cst_67 = arith.constant dense<0.000000e+00> : vector<8x384xf32>
    %95 = tpu.matmul %93, %94, %cst_67 {dimension_numbers = #tpu.dot_dimension_numbers<[1], [0], [0], [1], [0, 0, 1, 1], [], []>} : vector<8x8xbf16>, vector<8x384xbf16>, vector<8x384xf32> -> vector<8x384xf32>
    %96 = arith.addf %90, %95 : vector<8x384xf32>
    %c0_68 = arith.constant 0 : index
    %c1_69 = arith.constant 1 : index
    %97 = vector.load %arg7[%c0_68, %c1_69] : memref<8x434xf32, #tpu.memory_space<vmem>>, vector<8x384xf32>
    %c1_70 = arith.constant 1 : index
    %c0_71 = arith.constant 0 : index
    %c0_72 = arith.constant 0 : index
    %98 = vector.load %arg4[%c1_70, %c0_71, %c0_72] : memref<9x8x8xbf16, #tpu.memory_space<vmem>>, vector<1x8x8xbf16>
    %99 = vector.shape_cast %98 : vector<1x8x8xbf16> to vector<8x8xbf16>
    %100 = arith.truncf %97 : vector<8x384xf32> to vector<8x384xbf16>
    %cst_73 = arith.constant dense<0.000000e+00> : vector<8x384xf32>
    %101 = tpu.matmul %99, %100, %cst_73 {dimension_numbers = #tpu.dot_dimension_numbers<[1], [0], [0], [1], [0, 0, 1, 1], [], []>} : vector<8x8xbf16>, vector<8x384xbf16>, vector<8x384xf32> -> vector<8x384xf32>
    %102 = arith.addf %96, %101 : vector<8x384xf32>
    %c0_74 = arith.constant 0 : index
    %c2_75 = arith.constant 2 : index
    %103 = vector.load %arg7[%c0_74, %c2_75] : memref<8x434xf32, #tpu.memory_space<vmem>>, vector<8x384xf32>
    %c2_76 = arith.constant 2 : index
    %c0_77 = arith.constant 0 : index
    %c0_78 = arith.constant 0 : index
    %104 = vector.load %arg4[%c2_76, %c0_77, %c0_78] : memref<9x8x8xbf16, #tpu.memory_space<vmem>>, vector<1x8x8xbf16>
    %105 = vector.shape_cast %104 : vector<1x8x8xbf16> to vector<8x8xbf16>
    %106 = arith.truncf %103 : vector<8x384xf32> to vector<8x384xbf16>
    %cst_79 = arith.constant dense<0.000000e+00> : vector<8x384xf32>
    %107 = tpu.matmul %105, %106, %cst_79 {dimension_numbers = #tpu.dot_dimension_numbers<[1], [0], [0], [1], [0, 0, 1, 1], [], []>} : vector<8x8xbf16>, vector<8x384xbf16>, vector<8x384xf32> -> vector<8x384xf32>
    %108 = arith.addf %102, %107 : vector<8x384xf32>
    %c0_80 = arith.constant 0 : index
    %c24_81 = arith.constant 24 : index
    %109 = vector.load %arg7[%c0_80, %c24_81] : memref<8x434xf32, #tpu.memory_space<vmem>>, vector<8x384xf32>
    %c3_82 = arith.constant 3 : index
    %c0_83 = arith.constant 0 : index
    %c0_84 = arith.constant 0 : index
    %110 = vector.load %arg4[%c3_82, %c0_83, %c0_84] : memref<9x8x8xbf16, #tpu.memory_space<vmem>>, vector<1x8x8xbf16>
    %111 = vector.shape_cast %110 : vector<1x8x8xbf16> to vector<8x8xbf16>
    %112 = arith.truncf %109 : vector<8x384xf32> to vector<8x384xbf16>
    %cst_85 = arith.constant dense<0.000000e+00> : vector<8x384xf32>
    %113 = tpu.matmul %111, %112, %cst_85 {dimension_numbers = #tpu.dot_dimension_numbers<[1], [0], [0], [1], [0, 0, 1, 1], [], []>} : vector<8x8xbf16>, vector<8x384xbf16>, vector<8x384xf32> -> vector<8x384xf32>
    %114 = arith.addf %108, %113 : vector<8x384xf32>
    %c0_86 = arith.constant 0 : index
    %c25_87 = arith.constant 25 : index
    %115 = vector.load %arg7[%c0_86, %c25_87] : memref<8x434xf32, #tpu.memory_space<vmem>>, vector<8x384xf32>
    %c4_88 = arith.constant 4 : index
    %c0_89 = arith.constant 0 : index
    %c0_90 = arith.constant 0 : index
    %116 = vector.load %arg4[%c4_88, %c0_89, %c0_90] : memref<9x8x8xbf16, #tpu.memory_space<vmem>>, vector<1x8x8xbf16>
    %117 = vector.shape_cast %116 : vector<1x8x8xbf16> to vector<8x8xbf16>
    %118 = arith.truncf %115 : vector<8x384xf32> to vector<8x384xbf16>
    %cst_91 = arith.constant dense<0.000000e+00> : vector<8x384xf32>
    %119 = tpu.matmul %117, %118, %cst_91 {dimension_numbers = #tpu.dot_dimension_numbers<[1], [0], [0], [1], [0, 0, 1, 1], [], []>} : vector<8x8xbf16>, vector<8x384xbf16>, vector<8x384xf32> -> vector<8x384xf32>
    %120 = arith.addf %114, %119 : vector<8x384xf32>
    %c0_92 = arith.constant 0 : index
    %c26_93 = arith.constant 26 : index
    %121 = vector.load %arg7[%c0_92, %c26_93] : memref<8x434xf32, #tpu.memory_space<vmem>>, vector<8x384xf32>
    %c5_94 = arith.constant 5 : index
    %c0_95 = arith.constant 0 : index
    %c0_96 = arith.constant 0 : index
    %122 = vector.load %arg4[%c5_94, %c0_95, %c0_96] : memref<9x8x8xbf16, #tpu.memory_space<vmem>>, vector<1x8x8xbf16>
    %123 = vector.shape_cast %122 : vector<1x8x8xbf16> to vector<8x8xbf16>
    %124 = arith.truncf %121 : vector<8x384xf32> to vector<8x384xbf16>
    %cst_97 = arith.constant dense<0.000000e+00> : vector<8x384xf32>
    %125 = tpu.matmul %123, %124, %cst_97 {dimension_numbers = #tpu.dot_dimension_numbers<[1], [0], [0], [1], [0, 0, 1, 1], [], []>} : vector<8x8xbf16>, vector<8x384xbf16>, vector<8x384xf32> -> vector<8x384xf32>
    %126 = arith.addf %120, %125 : vector<8x384xf32>
    %c0_98 = arith.constant 0 : index
    %c48_99 = arith.constant 48 : index
    %127 = vector.load %arg7[%c0_98, %c48_99] : memref<8x434xf32, #tpu.memory_space<vmem>>, vector<8x384xf32>
    %c6_100 = arith.constant 6 : index
    %c0_101 = arith.constant 0 : index
    %c0_102 = arith.constant 0 : index
    %128 = vector.load %arg4[%c6_100, %c0_101, %c0_102] : memref<9x8x8xbf16, #tpu.memory_space<vmem>>, vector<1x8x8xbf16>
    %129 = vector.shape_cast %128 : vector<1x8x8xbf16> to vector<8x8xbf16>
    %130 = arith.truncf %127 : vector<8x384xf32> to vector<8x384xbf16>
    %cst_103 = arith.constant dense<0.000000e+00> : vector<8x384xf32>
    %131 = tpu.matmul %129, %130, %cst_103 {dimension_numbers = #tpu.dot_dimension_numbers<[1], [0], [0], [1], [0, 0, 1, 1], [], []>} : vector<8x8xbf16>, vector<8x384xbf16>, vector<8x384xf32> -> vector<8x384xf32>
    %132 = arith.addf %126, %131 : vector<8x384xf32>
    %c0_104 = arith.constant 0 : index
    %c49_105 = arith.constant 49 : index
    %133 = vector.load %arg7[%c0_104, %c49_105] : memref<8x434xf32, #tpu.memory_space<vmem>>, vector<8x384xf32>
    %c7_106 = arith.constant 7 : index
    %c0_107 = arith.constant 0 : index
    %c0_108 = arith.constant 0 : index
    %134 = vector.load %arg4[%c7_106, %c0_107, %c0_108] : memref<9x8x8xbf16, #tpu.memory_space<vmem>>, vector<1x8x8xbf16>
    %135 = vector.shape_cast %134 : vector<1x8x8xbf16> to vector<8x8xbf16>
    %136 = arith.truncf %133 : vector<8x384xf32> to vector<8x384xbf16>
    %cst_109 = arith.constant dense<0.000000e+00> : vector<8x384xf32>
    %137 = tpu.matmul %135, %136, %cst_109 {dimension_numbers = #tpu.dot_dimension_numbers<[1], [0], [0], [1], [0, 0, 1, 1], [], []>} : vector<8x8xbf16>, vector<8x384xbf16>, vector<8x384xf32> -> vector<8x384xf32>
    %138 = arith.addf %132, %137 : vector<8x384xf32>
    %c0_110 = arith.constant 0 : index
    %c50_111 = arith.constant 50 : index
    %139 = vector.load %arg7[%c0_110, %c50_111] : memref<8x434xf32, #tpu.memory_space<vmem>>, vector<8x384xf32>
    %c8_112 = arith.constant 8 : index
    %c0_113 = arith.constant 0 : index
    %c0_114 = arith.constant 0 : index
    %140 = vector.load %arg4[%c8_112, %c0_113, %c0_114] : memref<9x8x8xbf16, #tpu.memory_space<vmem>>, vector<1x8x8xbf16>
    %141 = vector.shape_cast %140 : vector<1x8x8xbf16> to vector<8x8xbf16>
    %142 = arith.truncf %139 : vector<8x384xf32> to vector<8x384xbf16>
    %cst_115 = arith.constant dense<0.000000e+00> : vector<8x384xf32>
    %143 = tpu.matmul %141, %142, %cst_115 {dimension_numbers = #tpu.dot_dimension_numbers<[1], [0], [0], [1], [0, 0, 1, 1], [], []>} : vector<8x8xbf16>, vector<8x384xbf16>, vector<8x384xf32> -> vector<8x384xf32>
    %144 = arith.addf %138, %143 : vector<8x384xf32>
    %145 = vector.broadcast %0 : vector<1x384xf32> to vector<8x384xf32>
    %146 = arith.mulf %144, %145 : vector<8x384xf32>
    %cst_116 = arith.constant dense<0.000000e+00> : vector<8xf32>
    %147 = vector.multi_reduction <add>, %146, %cst_116 [1] : vector<8x384xf32> to vector<8xf32>
    %148 = vector.shape_cast %147 : vector<8xf32> to vector<8x1xf32>
    %149 = arith.mulf %146, %144 : vector<8x384xf32>
    %cst_117 = arith.constant dense<0.000000e+00> : vector<8xf32>
    %150 = vector.multi_reduction <add>, %149, %cst_117 [1] : vector<8x384xf32> to vector<8xf32>
    %151 = vector.shape_cast %150 : vector<8xf32> to vector<8x1xf32>
    %cst_118 = arith.constant 3.906250e-03 : f32
    %152 = vector.broadcast %cst_118 : f32 to vector<8x1xf32>
    %153 = arith.mulf %148, %152 : vector<8x1xf32>
    %cst_119 = arith.constant 3.906250e-03 : f32
    %154 = vector.broadcast %cst_119 : f32 to vector<8x1xf32>
    %155 = arith.mulf %151, %154 : vector<8x1xf32>
    %156 = arith.mulf %153, %153 : vector<8x1xf32>
    %157 = arith.subf %155, %156 : vector<8x1xf32>
    %cst_120 = arith.constant 0.000000e+00 : f32
    %158 = vector.broadcast %cst_120 : f32 to vector<8x1xf32>
    %159 = arith.maximumf %157, %158 : vector<8x1xf32>
    %160 = vector.broadcast %153 : vector<8x1xf32> to vector<8x384xf32>
    %161 = arith.subf %144, %160 : vector<8x384xf32>
    %cst_121 = arith.constant 9.99999974E-6 : f32
    %162 = vector.broadcast %cst_121 : f32 to vector<8x1xf32>
    %163 = arith.addf %159, %162 : vector<8x1xf32>
    %164 = math.rsqrt %163 : vector<8x1xf32>
    %165 = vector.broadcast %164 : vector<8x1xf32> to vector<8x384xf32>
    %166 = arith.mulf %161, %165 : vector<8x384xf32>
    %cst_122 = arith.constant 0.000000e+00 : f32
    %167 = vector.broadcast %cst_122 : f32 to vector<8x384xf32>
    %168 = arith.maximumf %166, %167 : vector<8x384xf32>
    %169 = vector.broadcast %0 : vector<1x384xf32> to vector<8x384xf32>
    %170 = arith.mulf %168, %169 : vector<8x384xf32>
    %c0_123 = arith.constant 0 : index
    %c0_124 = arith.constant 0 : index
    %c0_125 = arith.constant 0 : index
    %171 = vector.load %arg5[%c0_123, %c0_124, %c0_125] : memref<1x8x384xf32, #tpu.memory_space<vmem>>, vector<1x8x384xf32>
    %172 = vector.shape_cast %171 : vector<1x8x384xf32> to vector<8x384xf32>
    %173 = vector.shape_cast %170 : vector<8x384xf32> to vector<1x8x384xf32>
    tpu.vector_store %arg5[%c0_123, %c0_124, %c0_125], %173 {strides = array<i32>} : memref<1x8x384xf32, #tpu.memory_space<vmem>>, vector<1x8x384xf32>,
    return
  }
  func.func @transform_0(%arg0: i32) -> (i32, i32, i32) {
    %c0_i32 = arith.constant 0 : i32
    %c0_i32_0 = arith.constant 0 : i32
    %c0_i32_1 = arith.constant 0 : i32
    return %arg0, %c0_i32, %c0_i32_0 : i32, i32, i32
  }
  func.func @transform_1(%arg0: i32) -> (i32, i32) {
    %c0_i32 = arith.constant 0 : i32
    %c0_i32_0 = arith.constant 0 : i32
    %c0_i32_1 = arith.constant 0 : i32
    return %c0_i32, %c0_i32_0 : i32, i32
  }
  func.func @transform_2(%arg0: i32) -> (i32, i32, i32) {
    %c0_i32 = arith.constant 0 : i32
    %c0_i32_0 = arith.constant 0 : i32
    %c0_i32_1 = arith.constant 0 : i32
    %c0_i32_2 = arith.constant 0 : i32
    return %c0_i32, %c0_i32_0, %c0_i32_1 : i32, i32, i32
  }
  func.func @transform_3(%arg0: i32) -> (i32, i32, i32) {
    %c0_i32 = arith.constant 0 : i32
    %c0_i32_0 = arith.constant 0 : i32
    %c0_i32_1 = arith.constant 0 : i32
    %c0_i32_2 = arith.constant 0 : i32
    return %c0_i32, %c0_i32_0, %c0_i32_1 : i32, i32, i32
  }
  func.func @transform_4(%arg0: i32) -> (i32, i32, i32) {
    %c0_i32 = arith.constant 0 : i32
    %c0_i32_0 = arith.constant 0 : i32
    %c0_i32_1 = arith.constant 0 : i32
    return %arg0, %c0_i32, %c0_i32_0 : i32, i32, i32
  }
}

</mosaic_0001>

<llo_original>
// kernel: tpu_custom_call.1
$region0: #{tpu_custom_call.1}
  #allocation0 [shape = 'u32[]', space=smem, size = 0x4, offset = 0x4, fixed_abs, tag = 'smem constant byte address 0x4 - core index']
  #allocation1 [shape = 'u32[144,128]{1,0:T(1,128)}', space=vmem, size = 0x12000, scoped, tag = 'internal scratch']
  #allocation2 [shape = 'f32[3,434]{1,0:T(4,128)}', space=vmem, size = 0x2000, scoped, tag = 'scratch operand']
  #allocation3 [shape = 'f32[8,434]{1,0:T(8,128)}', space=vmem, size = 0x4000, scoped, tag = 'scratch operand']
  %s0 = inlined_call_operand.vmem [shape: f32[2,3,384], index: 0, kind: input, shape index: {}]
  %s1 = inlined_call_operand.vmem [shape: f32[1,384], index: 1, kind: input, shape index: {}]
  %s2 = inlined_call_operand.vmem [shape: bf16[9,8,3], index: 2, kind: input, shape index: {}]
  %s3 = inlined_call_operand.vmem [shape: bf16[9,8,8], index: 3, kind: input, shape index: {}]
  %s4 = inlined_call_operand.hbm [shape: f32[2,8,384], index: 4, kind: output, shape index: {}]
  %s5 = sld [smem:[#allocation0]]
  $region49: #{tpu_custom_call.1} parent=0
    _
  %s7 = ssub.s32 1, %s5
  %s8 = scalar_select 0, %s7, %s5
  $region1: #{tpu_custom_call.1} parent=0
    #allocation4 [shape = 'u8[24576]{0}', space=vmem, size = 0x6000, scoped, tag = 'output window, operand 0']
    #allocation5 [shape = 's32[2]{0}', space=sflag, size = 0x8, scoped, tag = 'scoped memory for tpu_custom_call.1']
    %9 = vsyncpa [#allocation5], 0
    %s10 = scalar_lea.sflag [#allocation5], 1
    %11 = vsyncpa %s10, 0
    loop: start=0, step=1, limit=4
    $region2: #{tpu_custom_call.1} parent=1 // loop_pre_header
      _
    $region3: #{tpu_custom_call.1} parent=1 // loop_header
      %s13 = sphi 0, %s17
      %p14 = scmp.ge.s32.totalorder %s13, 4
      %s23 = sphi 0, %s25
      %s26 = sphi 0, %s23
      %s27 = sphi 0, %s26
      %s43 = sphi 0, %s27
      %s47 = sphi 0, %s47
      %s49 = sphi 0, %s47
      %s50 = sphi 0, %s49
      %s64 = sphi 0, %s50
      %s68 = sphi 0, %s68
      %s70 = sphi 0, %s68
      %s71 = sphi 0, %s70
      %s85 = sphi 0, %s71
      %s89 = sphi 0, %s89
      %s91 = sphi 0, %s89
      %s92 = sphi 0, %s91
      %s106 = sphi 0, %s92
      %s112 = sphi 0, %s114
      %s115 = sphi 0, %s112
      %s116 = sphi 0, %s115
      %s132 = sphi 0, %s116
    $region4: #{tpu_custom_call.1} parent=1 // loop_header_branch
      %16 = sbr.rel (%p14) target = $region8
    $region5: #{tpu_custom_call.1} parent=1 // loop_body
      %s18 = ssub.s32 %s13, 1
      %s19 = ssub.s32 %s13, 2
      %s20 = sadd.s32 %s13, 1
      %s21 = ssub.s32 %s13, %s20
      %p22 = scmp.eq.s32.totalorder %s21, 0
      %s24 = sadd.s32 %s23, 1
      %s25 = scalar_select %p22, %s23, %s24
      %p28 = pneg %p22
      %p29 = scmp.eq.s32.totalorder %s13, 1
      %p30 = por %p28, %p29
      %p31 = scmp.ne.s32.totalorder %s23, %s26
      %p32 = scmp.eq.s32.totalorder %s13, 0
      %p33 = por %p31, %p32
      %p34 = scmp.ne.s32.totalorder %s23, %s26
      %p35 = scmp.eq.s32.totalorder %s18, 1
      %p36 = por %p34, %p35
      %p37 = scmp.ne.s32.totalorder %s26, %s27
      %p38 = scmp.eq.s32.totalorder %s18, 0
      %p39 = por %p37, %p38
      %p40 = scmp.ne.s32.totalorder %s26, %s27
      %p41 = scmp.eq.s32.totalorder %s19, 1
      %p42 = por %p40, %p41
      %p44 = scmp.ne.s32.totalorder %s27, %s43
      %p45 = scmp.eq.s32.totalorder %s19, 0
      %p46 = por %p44, %p45
      %s48 = sadd.s32 %s47, 1
      %p51 = scmp.eq.s32.totalorder %s13, 1
      %p52 = scmp.ne.s32.totalorder %s47, %s49
      %p53 = scmp.eq.s32.totalorder %s13, 0
      %p54 = por %p52, %p53
      %p55 = scmp.ne.s32.totalorder %s47, %s49
      %p56 = scmp.eq.s32.totalorder %s18, 1
      %p57 = por %p55, %p56
      %p58 = scmp.ne.s32.totalorder %s49, %s50
      %p59 = scmp.eq.s32.totalorder %s18, 0
      %p60 = por %p58, %p59
      %p61 = scmp.ne.s32.totalorder %s49, %s50
      %p62 = scmp.eq.s32.totalorder %s19, 1
      %p63 = por %p61, %p62
      %p65 = scmp.ne.s32.totalorder %s50, %s64
      %p66 = scmp.eq.s32.totalorder %s19, 0
      %p67 = por %p65, %p66
      %s69 = sadd.s32 %s68, 1
      %p72 = scmp.eq.s32.totalorder %s13, 1
      %p73 = scmp.ne.s32.totalorder %s68, %s70
      %p74 = scmp.eq.s32.totalorder %s13, 0
      %p75 = por %p73, %p74
      %p76 = scmp.ne.s32.totalorder %s68, %s70
      %p77 = scmp.eq.s32.totalorder %s18, 1
      %p78 = por %p76, %p77
      %p79 = scmp.ne.s32.totalorder %s70, %s71
      %p80 = scmp.eq.s32.totalorder %s18, 0
      %p81 = por %p79, %p80
      %p82 = scmp.ne.s32.totalorder %s70, %s71
      %p83 = scmp.eq.s32.totalorder %s19, 1
      %p84 = por %p82, %p83
      %p86 = scmp.ne.s32.totalorder %s71, %s85
      %p87 = scmp.eq.s32.totalorder %s19, 0
      %p88 = por %p86, %p87
      %s90 = sadd.s32 %s89, 1
      %p93 = scmp.eq.s32.totalorder %s13, 1
      %p94 = scmp.ne.s32.totalorder %s89, %s91
      %p95 = scmp.eq.s32.totalorder %s13, 0
      %p96 = por %p94, %p95
      %p97 = scmp.ne.s32.totalorder %s89, %s91
      %p98 = scmp.eq.s32.totalorder %s18, 1
      %p99 = por %p97, %p98
      %p100 = scmp.ne.s32.totalorder %s91, %s92
      %p101 = scmp.eq.s32.totalorder %s18, 0
      %p102 = por %p100, %p101
      %p103 = scmp.ne.s32.totalorder %s91, %s92
      %p104 = scmp.eq.s32.totalorder %s19, 1
      %p105 = por %p103, %p104
      %p107 = scmp.ne.s32.totalorder %s92, %s106
      %p108 = scmp.eq.s32.totalorder %s19, 0
      %p109 = por %p107, %p108
      %s110 = ssub.s32 %s13, %s20
      %p111 = scmp.eq.s32.totalorder %s110, 0
      %s113 = sadd.s32 %s112, 1
      %s114 = scalar_select %p111, %s112, %s113
      %p117 = pneg %p111
      %p118 = scmp.eq.s32.totalorder %s13, 1
      %p119 = por %p117, %p118
      %p120 = scmp.ne.s32.totalorder %s112, %s115
      %p121 = scmp.eq.s32.totalorder %s13, 0
      %p122 = por %p120, %p121
      %p123 = scmp.ne.s32.totalorder %s112, %s115
      %p124 = scmp.eq.s32.totalorder %s18, 1
      %p125 = por %p123, %p124
      %p126 = scmp.ne.s32.totalorder %s115, %s116
      %p127 = scmp.eq.s32.totalorder %s18, 0
      %p128 = por %p126, %p127
      %p129 = scmp.ne.s32.totalorder %s115, %s116
      %p130 = scmp.eq.s32.totalorder %s19, 1
      %p131 = por %p129, %p130
      %p133 = scmp.ne.s32.totalorder %s116, %s132
      %p134 = scmp.eq.s32.totalorder %s19, 0
      %p135 = por %p133, %p134
      %p136 = scmp.le.s32.totalorder 1, %s13
      %p137 = scmp.lt.s32.totalorder %s13, 3
      %p138 = pnand %p136, %p137
      %p139 = pneg %p138
      // Predicated region
      $region9: #{tpu_custom_call.1} parent=5 // pred_check
        _
      $region10: #{tpu_custom_call.1} parent=5 // pred_check_branch
        %141 = sbr.rel (%p138) target = $region12
      $region11: #{tpu_custom_call.1} parent=5 // pred_region
        %s142 = ssub.s32 %s13, 1
        // Predicated region
        $region13: #{tpu_custom_call.1} parent=11 // pred_check
          %p143 = pneg %p60
        $region14: #{tpu_custom_call.1} parent=11 // pred_check_branch
          %145 = sbr.rel (%p143) target = $region16
        $region15: #{tpu_custom_call.1} parent=11 // pred_region
          _
        $region16: #{tpu_custom_call.1} parent=11 // pred_fallthru
          _
        // Predicated region
        $region17: #{tpu_custom_call.1} parent=11 // pred_check
          %p146 = pneg %p81
        $region18: #{tpu_custom_call.1} parent=11 // pred_check_branch
          %148 = sbr.rel (%p146) target = $region20
        $region19: #{tpu_custom_call.1} parent=11 // pred_region
          _
        $region20: #{tpu_custom_call.1} parent=11 // pred_fallthru
          _
        // Predicated region
        $region21: #{tpu_custom_call.1} parent=11 // pred_check
          %p149 = pneg %p102
        $region22: #{tpu_custom_call.1} parent=11 // pred_check_branch
          %151 = sbr.rel (%p149) target = $region24
        $region23: #{tpu_custom_call.1} parent=11 // pred_region
          _
        $region24: #{tpu_custom_call.1} parent=11 // pred_fallthru
          _
      $region12: #{tpu_custom_call.1} parent=5 // pred_fallthru
        _
      %p152 = scmp.lt.s32.totalorder %s13, 2
      // Predicated region
      $region25: #{tpu_custom_call.1} parent=5 // pred_check
        %p153 = pneg %p152
      $region26: #{tpu_custom_call.1} parent=5 // pred_check_branch
        %155 = sbr.rel (%p153) target = $region28
      $region27: #{tpu_custom_call.1} parent=5 // pred_region
        // Predicated region
        $region29: #{tpu_custom_call.1} parent=27 // pred_check
          %p156 = pneg %p33
        $region30: #{tpu_custom_call.1} parent=27 // pred_check_branch
          %158 = sbr.rel (%p156) target = $region32
        $region31: #{tpu_custom_call.1} parent=27 // pred_region
          %p159 = scmp.lt.s32.totalorder %s13, 1
          %s160 = scalar_select %p159, %s13, 1
          %s161 = smul.addr %s160, 3
          %s162 = smul.addr %s161, 4
          %s163 = scalar_lea.vmem %s0, %s162
        $region32: #{tpu_custom_call.1} parent=27 // pred_fallthru
          _
      $region28: #{tpu_custom_call.1} parent=5 // pred_fallthru
        _
      %p164 = scmp.le.s32.totalorder 1, %s13
      %p165 = scmp.lt.s32.totalorder %s13, 3
      %p166 = pnand %p164, %p165
      %p167 = pneg %p166
      // Predicated region
      $region33: #{tpu_custom_call.1} parent=5 // pred_check
        _
      $region34: #{tpu_custom_call.1} parent=5 // pred_check_branch
        %169 = sbr.rel (%p166) target = $region36
      $region35: #{tpu_custom_call.1} parent=5 // pred_region
        %s170 = ssub.s32 %s13, 1
        %p171 = scmp.lt.s32.totalorder %s18, 1
        %s172 = scalar_select %p171, %s18, 1
        %s173 = smul.addr %s172, 3
        %s174 = smul.addr %s173, 4
        %s175 = scalar_lea.vmem %s0, %s174
        %p176 = pneg %p39
        %p177 = pneg %p36
        %p178 = pneg %p60
        %p179 = pneg %p57
        %p180 = pneg %p81
        %p181 = pneg %p78
        %p182 = pneg %p102
        %p183 = pneg %p99
        %p184 = pneg %p128
        %p185 = pneg %p125
        %s186 = sand.u32 %s115, 1
        %s187 = scalar_lea.sflag [#allocation5], %s186
        %s188 = sand.u32 %s115, 1
        %s189 = smul.addr %s188, 24
        %s190 = scalar_lea.vmem [#allocation4], %s189
        %p191 = scmp.lt.s32.totalorder %s18, 1
        %s192 = scalar_select %p191, %s18, 1
        %s193 = smul.addr %s192, 3
        %s194 = smul.addr %s193, 4
        %s195 = scalar_lea.vmem %s0, %s194
        %v197 = vld [vmem:[%s1] sm:$0x7]
        %198 = vst [vmem:[#allocation2] sm:$0x77] 0.0
        %vm199 = vcmask 1042432
        %vm200 = vcmask 407556
        %vm201 = vmor %vm200, %vm199
        %202 = vst.msk [vmem:[#allocation2 + $0x8] sm:$0x77] %vm201, 0.0
        %v203 = vld [vmem:[%s195] sm:$0x77]
        %v204 = vld [vmem:[%s195 + $0x8] sm:$0x7]
        %207 = vrot.lane.b32.xlu0 %v203, 25
        %v208 = vpop.permute.xlu0 %207
        %209 = vrot.lane.b32.xlu0 %v204, 25
        %v210 = vpop.permute.xlu0 %209
        %v211 = vrot.slane %v208, 4
        %v212 = vrot.slane %v210, 4
        %vm213 = vcmask 203776
        %v214 = vsel %vm213, %v211, %v208
        %vm215 = vcmask 1043456
        %v216 = vsel %vm215, %v211, %v212
        %v217 = vsel %vm213, %v216, %v210
        %vm220 = vcmask 1042632
        %vm221 = vcmask 1046532
        %vm222 = vmor %vm221, %vm220
        %223 = vst.msk [vmem:[#allocation2] sm:$0x77] %vm222, %v214
        %vm224 = vcmask 202756
        %vm225 = vmor %vm224, %vm199
        %226 = vst.msk [vmem:[#allocation2 + $0x8] sm:$0x77] %vm225, %v217
        %v227 = vld [vmem:[#allocation2] sm:$0x77]
        %v228 = vld [vmem:[#allocation2 + $0x8] sm:$0x7]
        %v229 = vld [vmem:[%s2] sm:$0xf]
        %v231 = vcombine.high %v227, %v227
        %v233 = vpack.c.bf16 %v227, %v227
        %v234 = vpack.c.bf16 %v231, %v231
        %v235 = vpack.c.bf16 %v228, %v228
        %v236 = vld [vmem:[#allocation2 + $0x8] sm:$0x77]
        %s237 = scalar_lea.vmem %s2, 4
        %v238 = vld [vmem:[%s237] sm:$0xf]
        %v240 = vcombine.high %v236, %v236
        %v242 = vpack.c.bf16 %v236, %v236
        %v243 = vpack.c.bf16 %v240, %v240
        %248 = vrot.lane.b32.xlu0 %v233, 127
        %v249 = vpop.permute.xlu0 %248
        %250 = vrot.lane.b32.xlu0 %v234, 127
        %v251 = vpop.permute.xlu0 %250
        %252 = vrot.lane.b32.xlu0 %v242, 127
        %v253 = vpop.permute.xlu0 %252
        %254 = vrot.lane.b32.xlu0 %v243, 127
        %v255 = vpop.permute.xlu0 %254
        %vm256 = vcmask 1039360
        %v257 = vsel %vm256, %v249, %v251
        %v258 = vsel %vm256, %v251, %v253
        %v259 = vsel %vm256, %v253, %v255
        %vm260 = vcmask 23552
        %v262 = vsel %vm260, %v238, 0
        %vm264 = vcmask 1040384
        %vm265 = vcmask 1041408
        %v266 = vsel %vm264, 4294967295, 65535
        %v267 = vsel %vm265, %v266, 0
        %v269 = vand.u32 %v257, %v267
        %v272 = vand.u32 %v258, %v267
        %v275 = vand.u32 %v259, %v267
        %277 = vmatprep.subr.bf16.mxu0 %v272
        %278 = vmatpush1.bf16.msra.mxu0 %v269
        %279 = vmatprep.subr.bf16.mxu0 0
        %280 = vmatpush1.bf16.msra.mxu0 0
        %281 = vmatprep.subr.bf16.mxu0 0
        %282 = vmatpush1.bf16.msra.mxu0 0
        %283 = vmatprep.subr.bf16.mxu0 0
        %284 = vmatpush1.bf16.msra.mxu0 0
        %285 = vmatprep.subr.bf16.mxu0 0
        %286 = vmatpush1.bf16.msra.mxu0 0
        %287 = vmatprep.subr.bf16.mxu0 0
        %288 = vmatpush1.bf16.msra.mxu0 0
        %289 = vmatprep.subr.bf16.mxu0 0
        %290 = vmatpush1.bf16.msra.mxu0 0
        %291 = vmatprep.subr.bf16.mxu0 0
        %292 = vmatpush1.bf16.msra.mxu0 0
        %293 = vmatprep.subr.bf16.mxu0 0
        %294 = vmatpush1.bf16.msra.mxu0 0
        %295 = vmatprep.subr.bf16.mxu0 0
        %296 = vmatpush1.bf16.msra.mxu0 0
        %297 = vmatprep.subr.bf16.mxu0 0
        %298 = vmatpush1.bf16.msra.mxu0 0
        %299 = vmatprep.subr.bf16.mxu0 0
        %300 = vmatpush1.bf16.msra.mxu0 0
        %301 = vmatprep.subr.bf16.mxu0 0
        %302 = vmatpush1.bf16.msra.mxu0 0
        %303 = vmatprep.subr.bf16.mxu0 0
        %304 = vmatpush1.bf16.msra.mxu0 0
        %305 = vmatprep.subr.bf16.mxu0 0
        %306 = vmatpush1.bf16.msra.mxu0 0
        %307 = vmatprep.subr.bf16.mxu0 0
        %308 = vmatpush1.bf16.msra.mxu0 0
        %309 = vmatprep.mubr.bf16.mxu0 0
        %310 = vmatmul.mubr.bf16.gmra.mrb[0].mxu0 %v262
        %v311 = vpop.f32.mrb[0].mxu0
        %v312 = vadd.f32 0.0, %v311
        %v313 = vpop.f32.mrb[0].mxu0
        %v314 = vadd.f32 0.0, %v313
        %v315 = vpop.f32.mrb[0].mxu0
        %v316 = vpop.f32.mrb[0].mxu0
        %317 = vdwg.mxu0
        %318 = vmatprep.subr.bf16.mxu0 0
        %319 = vmatpush1.bf16.msra.mxu0 %v275
        %320 = vmatprep.subr.bf16.mxu0 0
        %321 = vmatpush1.bf16.msra.mxu0 0
        %322 = vmatprep.subr.bf16.mxu0 0
        %323 = vmatpush1.bf16.msra.mxu0 0
        %324 = vmatprep.subr.bf16.mxu0 0
        %325 = vmatpush1.bf16.msra.mxu0 0
        %326 = vmatprep.subr.bf16.mxu0 0
        %327 = vmatpush1.bf16.msra.mxu0 0
        %328 = vmatprep.subr.bf16.mxu0 0
        %329 = vmatpush1.bf16.msra.mxu0 0
        %330 = vmatprep.subr.bf16.mxu0 0
        %331 = vmatpush1.bf16.msra.mxu0 0
        %332 = vmatprep.subr.bf16.mxu0 0
        %333 = vmatpush1.bf16.msra.mxu0 0
        %334 = vmatprep.subr.bf16.mxu0 0
        %335 = vmatpush1.bf16.msra.mxu0 0
        %336 = vmatprep.subr.bf16.mxu0 0
        %337 = vmatpush1.bf16.msra.mxu0 0
        %338 = vmatprep.subr.bf16.mxu0 0
        %339 = vmatpush1.bf16.msra.mxu0 0
        %340 = vmatprep.subr.bf16.mxu0 0
        %341 = vmatpush1.bf16.msra.mxu0 0
        %342 = vmatprep.subr.bf16.mxu0 0
        %343 = vmatpush1.bf16.msra.mxu0 0
        %344 = vmatprep.subr.bf16.mxu0 0
        %345 = vmatpush1.bf16.msra.mxu0 0
        %346 = vmatprep.subr.bf16.mxu0 0
        %347 = vmatpush1.bf16.msra.mxu0 0
        %348 = vmatprep.subr.bf16.mxu0 0
        %349 = vmatpush1.bf16.msra.mxu0 0
        %350 = vmatprep.mubr.bf16.mxu0 0
        %351 = vmatmul.mubr.bf16.gmra.mrb[0].mxu0 %v262
        %v352 = vpop.f32.mrb[0].mxu0
        %v353 = vadd.f32 0.0, %v352
        %v354 = vpop.f32.mrb[0].mxu0
        %v355 = vpop.f32.mrb[0].mxu0
        %v356 = vpop.f32.mrb[0].mxu0
        %357 = vdwg.mxu0
        %v359 = vsel %vm260, %v229, 0
        %v362 = vand.u32 %v233, %v267
        %v365 = vand.u32 %v234, %v267
        %v368 = vand.u32 %v235, %v267
        %370 = vmatprep.subr.bf16.mxu0 %v365
        %371 = vmatpush1.bf16.msra.mxu0 %v362
        %372 = vmatprep.subr.bf16.mxu0 0
        %373 = vmatpush1.bf16.msra.mxu0 0
        %374 = vmatprep.subr.bf16.mxu0 0
        %375 = vmatpush1.bf16.msra.mxu0 0
        %376 = vmatprep.subr.bf16.mxu0 0
        %377 = vmatpush1.bf16.msra.mxu0 0
        %378 = vmatprep.subr.bf16.mxu0 0
        %379 = vmatpush1.bf16.msra.mxu0 0
        %380 = vmatprep.subr.bf16.mxu0 0
        %381 = vmatpush1.bf16.msra.mxu0 0
        %382 = vmatprep.subr.bf16.mxu0 0
        %383 = vmatpush1.bf16.msra.mxu0 0
        %384 = vmatprep.subr.bf16.mxu0 0
        %385 = vmatpush1.bf16.msra.mxu0 0
        %386 = vmatprep.subr.bf16.mxu0 0
        %387 = vmatpush1.bf16.msra.mxu0 0
        %388 = vmatprep.subr.bf16.mxu0 0
        %389 = vmatpush1.bf16.msra.mxu0 0
        %390 = vmatprep.subr.bf16.mxu0 0
        %391 = vmatpush1.bf16.msra.mxu0 0
        %392 = vmatprep.subr.bf16.mxu0 0
        %393 = vmatpush1.bf16.msra.mxu0 0
        %394 = vmatprep.subr.bf16.mxu0 0
        %395 = vmatpush1.bf16.msra.mxu0 0
        %396 = vmatprep.subr.bf16.mxu0 0
        %397 = vmatpush1.bf16.msra.mxu0 0
        %398 = vmatprep.subr.bf16.mxu0 0
        %399 = vmatpush1.bf16.msra.mxu0 0
        %400 = vmatprep.subr.bf16.mxu0 0
        %401 = vmatpush1.bf16.msra.mxu0 0
        %402 = vmatprep.mubr.bf16.mxu0 0
        %403 = vmatmul.mubr.bf16.gmra.mrb[0].mxu0 %v359
        %v404 = vpop.f32.mrb[0].mxu0
        %v405 = vadd.f32 %v312, %v404
        %v406 = vpop.f32.mrb[0].mxu0
        %v407 = vadd.f32 %v314, %v406
        %v408 = vpop.f32.mrb[0].mxu0
        %v409 = vpop.f32.mrb[0].mxu0
        %410 = vdwg.mxu0
        %411 = vmatprep.subr.bf16.mxu0 0
        %412 = vmatpush1.bf16.msra.mxu0 %v368
        %413 = vmatprep.subr.bf16.mxu0 0
        %414 = vmatpush1.bf16.msra.mxu0 0
        %415 = vmatprep.subr.bf16.mxu0 0
        %416 = vmatpush1.bf16.msra.mxu0 0
        %417 = vmatprep.subr.bf16.mxu0 0
        %418 = vmatpush1.bf16.msra.mxu0 0
        %419 = vmatprep.subr.bf16.mxu0 0
        %420 = vmatpush1.bf16.msra.mxu0 0
        %421 = vmatprep.subr.bf16.mxu0 0
        %422 = vmatpush1.bf16.msra.mxu0 0
        %423 = vmatprep.subr.bf16.mxu0 0
        %424 = vmatpush1.bf16.msra.mxu0 0
        %425 = vmatprep.subr.bf16.mxu0 0
        %426 = vmatpush1.bf16.msra.mxu0 0
        %427 = vmatprep.subr.bf16.mxu0 0
        %428 = vmatpush1.bf16.msra.mxu0 0
        %429 = vmatprep.subr.bf16.mxu0 0
        %430 = vmatpush1.bf16.msra.mxu0 0
        %431 = vmatprep.subr.bf16.mxu0 0
        %432 = vmatpush1.bf16.msra.mxu0 0
        %433 = vmatprep.subr.bf16.mxu0 0
        %434 = vmatpush1.bf16.msra.mxu0 0
        %435 = vmatprep.subr.bf16.mxu0 0
        %436 = vmatpush1.bf16.msra.mxu0 0
        %437 = vmatprep.subr.bf16.mxu0 0
        %438 = vmatpush1.bf16.msra.mxu0 0
        %439 = vmatprep.subr.bf16.mxu0 0
        %440 = vmatpush1.bf16.msra.mxu0 0
        %441 = vmatprep.subr.bf16.mxu0 0
        %442 = vmatpush1.bf16.msra.mxu0 0
        %443 = vmatprep.mubr.bf16.mxu0 0
        %444 = vmatmul.mubr.bf16.gmra.mrb[0].mxu0 %v359
        %v445 = vpop.f32.mrb[0].mxu0
        %v446 = vadd.f32 %v353, %v445
        %v447 = vpop.f32.mrb[0].mxu0
        %v448 = vpop.f32.mrb[0].mxu0
        %v449 = vpop.f32.mrb[0].mxu0
        %450 = vdwg.mxu0
        %v451 = vld [vmem:[#allocation2] sm:$0x77]
        %v452 = vld [vmem:[#allocation2 + $0x8] sm:$0x77]
        %s453 = scalar_lea.vmem %s2, 8
        %v454 = vld [vmem:[%s453] sm:$0xf]
        %v457 = vcombine.high %v451, %v451
        %v458 = vcombine.high %v452, %v452
        %v461 = vpack.c.bf16 %v451, %v451
        %v462 = vpack.c.bf16 %v457, %v457
        %v463 = vpack.c.bf16 %v452, %v452
        %v464 = vpack.c.bf16 %v458, %v458
        %469 = vrot.lane.b32.xlu0 %v461, 126
        %v470 = vpop.permute.xlu0 %469
        %471 = vrot.lane.b32.xlu0 %v462, 126
        %v472 = vpop.permute.xlu0 %471
        %473 = vrot.lane.b32.xlu0 %v463, 126
        %v474 = vpop.permute.xlu0 %473
        %475 = vrot.lane.b32.xlu0 %v464, 126
        %v476 = vpop.permute.xlu0 %475
        %vm477 = vcmask 1031168
        %v478 = vsel %vm477, %v470, %v472
        %v479 = vsel %vm477, %v472, %v474
        %v480 = vsel %vm477, %v474, %v476
        %v482 = vsel %vm260, %v454, 0
        %v485 = vand.u32 %v478, %v267
        %v488 = vand.u32 %v479, %v267
        %v491 = vand.u32 %v480, %v267
        %493 = vmatprep.subr.bf16.mxu0 %v488
        %494 = vmatpush1.bf16.msra.mxu0 %v485
        %495 = vmatprep.subr.bf16.mxu0 0
        %496 = vmatpush1.bf16.msra.mxu0 0
        %497 = vmatprep.subr.bf16.mxu0 0
        %498 = vmatpush1.bf16.msra.mxu0 0
        %499 = vmatprep.subr.bf16.mxu0 0
        %500 = vmatpush1.bf16.msra.mxu0 0
        %501 = vmatprep.subr.bf16.mxu0 0
        %502 = vmatpush1.bf16.msra.mxu0 0
        %503 = vmatprep.subr.bf16.mxu0 0
        %504 = vmatpush1.bf16.msra.mxu0 0
        %505 = vmatprep.subr.bf16.mxu0 0
        %506 = vmatpush1.bf16.msra.mxu0 0
        %507 = vmatprep.subr.bf16.mxu0 0
        %508 = vmatpush1.bf16.msra.mxu0 0
        %509 = vmatprep.subr.bf16.mxu0 0
        %510 = vmatpush1.bf16.msra.mxu0 0
        %511 = vmatprep.subr.bf16.mxu0 0
        %512 = vmatpush1.bf16.msra.mxu0 0
        %513 = vmatprep.subr.bf16.mxu0 0
        %514 = vmatpush1.bf16.msra.mxu0 0
        %515 = vmatprep.subr.bf16.mxu0 0
        %516 = vmatpush1.bf16.msra.mxu0 0
        %517 = vmatprep.subr.bf16.mxu0 0
        %518 = vmatpush1.bf16.msra.mxu0 0
        %519 = vmatprep.subr.bf16.mxu0 0
        %520 = vmatpush1.bf16.msra.mxu0 0
        %521 = vmatprep.subr.bf16.mxu0 0
        %522 = vmatpush1.bf16.msra.mxu0 0
        %523 = vmatprep.subr.bf16.mxu0 0
        %524 = vmatpush1.bf16.msra.mxu0 0
        %525 = vmatprep.mubr.bf16.mxu0 0
        %526 = vmatmul.mubr.bf16.gmra.mrb[0].mxu0 %v482
        %v527 = vpop.f32.mrb[0].mxu0
        %v528 = vadd.f32 0.0, %v527
        %v529 = vpop.f32.mrb[0].mxu0
        %v530 = vadd.f32 0.0, %v529
        %v531 = vpop.f32.mrb[0].mxu0
        %v532 = vpop.f32.mrb[0].mxu0
        %533 = vdwg.mxu0
        %534 = vmatprep.subr.bf16.mxu0 0
        %535 = vmatpush1.bf16.msra.mxu0 %v491
        %536 = vmatprep.subr.bf16.mxu0 0
        %537 = vmatpush1.bf16.msra.mxu0 0
        %538 = vmatprep.subr.bf16.mxu0 0
        %539 = vmatpush1.bf16.msra.mxu0 0
        %540 = vmatprep.subr.bf16.mxu0 0
        %541 = vmatpush1.bf16.msra.mxu0 0
        %542 = vmatprep.subr.bf16.mxu0 0
        %543 = vmatpush1.bf16.msra.mxu0 0
        %544 = vmatprep.subr.bf16.mxu0 0
        %545 = vmatpush1.bf16.msra.mxu0 0
        %546 = vmatprep.subr.bf16.mxu0 0
        %547 = vmatpush1.bf16.msra.mxu0 0
        %548 = vmatprep.subr.bf16.mxu0 0
        %549 = vmatpush1.bf16.msra.mxu0 0
        %550 = vmatprep.subr.bf16.mxu0 0
        %551 = vmatpush1.bf16.msra.mxu0 0
        %552 = vmatprep.subr.bf16.mxu0 0
        %553 = vmatpush1.bf16.msra.mxu0 0
        %554 = vmatprep.subr.bf16.mxu0 0
        %555 = vmatpush1.bf16.msra.mxu0 0
        %556 = vmatprep.subr.bf16.mxu0 0
        %557 = vmatpush1.bf16.msra.mxu0 0
        %558 = vmatprep.subr.bf16.mxu0 0
        %559 = vmatpush1.bf16.msra.mxu0 0
        %560 = vmatprep.subr.bf16.mxu0 0
        %561 = vmatpush1.bf16.msra.mxu0 0
        %562 = vmatprep.subr.bf16.mxu0 0
        %563 = vmatpush1.bf16.msra.mxu0 0
        %564 = vmatprep.subr.bf16.mxu0 0
        %565 = vmatpush1.bf16.msra.mxu0 0
        %566 = vmatprep.mubr.bf16.mxu0 0
        %567 = vmatmul.mubr.bf16.gmra.mrb[0].mxu0 %v482
        %v568 = vpop.f32.mrb[0].mxu0
        %v569 = vadd.f32 0.0, %v568
        %v570 = vpop.f32.mrb[0].mxu0
        %v571 = vpop.f32.mrb[0].mxu0
        %v572 = vpop.f32.mrb[0].mxu0
        %573 = vdwg.mxu0
        %v574 = vadd.f32 %v405, %v528
        %v575 = vadd.f32 %v407, %v530
        %v576 = vadd.f32 %v446, %v569
        %v577 = vld [vmem:[#allocation2] sm:$0x77]
        %v578 = vld [vmem:[#allocation2 + $0x8] sm:$0x77]
        %s579 = scalar_lea.vmem %s2, 12
        %v580 = vld [vmem:[%s579] sm:$0xf]
        %v583 = vcombine.high %v577, %v577
        %v584 = vcombine.high %v578, %v578
        %v587 = vpack.c.bf16 %v577, %v577
        %v588 = vpack.c.bf16 %v583, %v583
        %v589 = vpack.c.bf16 %v578, %v578
        %v590 = vpack.c.bf16 %v584, %v584
        %595 = vrot.lane.b32.xlu0 %v587, 104
        %v596 = vpop.permute.xlu0 %595
        %597 = vrot.lane.b32.xlu0 %v588, 104
        %v598 = vpop.permute.xlu0 %597
        %599 = vrot.lane.b32.xlu0 %v589, 104
        %v600 = vpop.permute.xlu0 %599
        %601 = vrot.lane.b32.xlu0 %v590, 104
        %v602 = vpop.permute.xlu0 %601
        %vm603 = vcmask 850944
        %v604 = vsel %vm603, %v596, %v598
        %v605 = vsel %vm603, %v598, %v600
        %v606 = vsel %vm603, %v600, %v602
        %v608 = vsel %vm260, %v580, 0
        %v611 = vand.u32 %v604, %v267
        %v614 = vand.u32 %v605, %v267
        %v617 = vand.u32 %v606, %v267
        %619 = vmatprep.subr.bf16.mxu0 %v614
        %620 = vmatpush1.bf16.msra.mxu0 %v611
        %621 = vmatprep.subr.bf16.mxu0 0
        %622 = vmatpush1.bf16.msra.mxu0 0
        %623 = vmatprep.subr.bf16.mxu0 0
        %624 = vmatpush1.bf16.msra.mxu0 0
        %625 = vmatprep.subr.bf16.mxu0 0
        %626 = vmatpush1.bf16.msra.mxu0 0
        %627 = vmatprep.subr.bf16.mxu0 0
        %628 = vmatpush1.bf16.msra.mxu0 0
        %629 = vmatprep.subr.bf16.mxu0 0
        %630 = vmatpush1.bf16.msra.mxu0 0
        %631 = vmatprep.subr.bf16.mxu0 0
        %632 = vmatpush1.bf16.msra.mxu0 0
        %633 = vmatprep.subr.bf16.mxu0 0
        %634 = vmatpush1.bf16.msra.mxu0 0
        %635 = vmatprep.subr.bf16.mxu0 0
        %636 = vmatpush1.bf16.msra.mxu0 0
        %637 = vmatprep.subr.bf16.mxu0 0
        %638 = vmatpush1.bf16.msra.mxu0 0
        %639 = vmatprep.subr.bf16.mxu0 0
        %640 = vmatpush1.bf16.msra.mxu0 0
        %641 = vmatprep.subr.bf16.mxu0 0
        %642 = vmatpush1.bf16.msra.mxu0 0
        %643 = vmatprep.subr.bf16.mxu0 0
        %644 = vmatpush1.bf16.msra.mxu0 0
        %645 = vmatprep.subr.bf16.mxu0 0
        %646 = vmatpush1.bf16.msra.mxu0 0
        %647 = vmatprep.subr.bf16.mxu0 0
        %648 = vmatpush1.bf16.msra.mxu0 0
        %649 = vmatprep.subr.bf16.mxu0 0
        %650 = vmatpush1.bf16.msra.mxu0 0
        %651 = vmatprep.mubr.bf16.mxu0 0
        %652 = vmatmul.mubr.bf16.gmra.mrb[0].mxu0 %v608
        %v653 = vpop.f32.mrb[0].mxu0
        %v654 = vadd.f32 0.0, %v653
        %v655 = vpop.f32.mrb[0].mxu0
        %v656 = vadd.f32 0.0, %v655
        %v657 = vpop.f32.mrb[0].mxu0
        %v658 = vpop.f32.mrb[0].mxu0
        %659 = vdwg.mxu0
        %660 = vmatprep.subr.bf16.mxu0 0
        %661 = vmatpush1.bf16.msra.mxu0 %v617
        %662 = vmatprep.subr.bf16.mxu0 0
        %663 = vmatpush1.bf16.msra.mxu0 0
        %664 = vmatprep.subr.bf16.mxu0 0
        %665 = vmatpush1.bf16.msra.mxu0 0
        %666 = vmatprep.subr.bf16.mxu0 0
        %667 = vmatpush1.bf16.msra.mxu0 0
        %668 = vmatprep.subr.bf16.mxu0 0
        %669 = vmatpush1.bf16.msra.mxu0 0
        %670 = vmatprep.subr.bf16.mxu0 0
        %671 = vmatpush1.bf16.msra.mxu0 0
        %672 = vmatprep.subr.bf16.mxu0 0
        %673 = vmatpush1.bf16.msra.mxu0 0
        %674 = vmatprep.subr.bf16.mxu0 0
        %675 = vmatpush1.bf16.msra.mxu0 0
        %676 = vmatprep.subr.bf16.mxu0 0
        %677 = vmatpush1.bf16.msra.mxu0 0
        %678 = vmatprep.subr.bf16.mxu0 0
        %679 = vmatpush1.bf16.msra.mxu0 0
        %680 = vmatprep.subr.bf16.mxu0 0
        %681 = vmatpush1.bf16.msra.mxu0 0
        %682 = vmatprep.subr.bf16.mxu0 0
        %683 = vmatpush1.bf16.msra.mxu0 0
        %684 = vmatprep.subr.bf16.mxu0 0
        %685 = vmatpush1.bf16.msra.mxu0 0
        %686 = vmatprep.subr.bf16.mxu0 0
        %687 = vmatpush1.bf16.msra.mxu0 0
        %688 = vmatprep.subr.bf16.mxu0 0
        %689 = vmatpush1.bf16.msra.mxu0 0
        %690 = vmatprep.subr.bf16.mxu0 0
        %691 = vmatpush1.bf16.msra.mxu0 0
        %692 = vmatprep.mubr.bf16.mxu0 0
        %693 = vmatmul.mubr.bf16.gmra.mrb[0].mxu0 %v608
        %v694 = vpop.f32.mrb[0].mxu0
        %v695 = vadd.f32 0.0, %v694
        %v696 = vpop.f32.mrb[0].mxu0
        %v697 = vpop.f32.mrb[0].mxu0
        %v698 = vpop.f32.mrb[0].mxu0
        %699 = vdwg.mxu0
        %v700 = vadd.f32 %v574, %v654
        %v701 = vadd.f32 %v575, %v656
        %v702 = vadd.f32 %v576, %v695
        %v703 = vld [vmem:[#allocation2] sm:$0x77]
        %v704 = vld [vmem:[#allocation2 + $0x8] sm:$0x77]
        %s705 = scalar_lea.vmem %s2, 16
        %v706 = vld [vmem:[%s705] sm:$0xf]
        %v709 = vcombine.high %v703, %v703
        %v710 = vcombine.high %v704, %v704
        %v713 = vpack.c.bf16 %v703, %v703
        %v714 = vpack.c.bf16 %v709, %v709
        %v715 = vpack.c.bf16 %v704, %v704
        %v716 = vpack.c.bf16 %v710, %v710
        %721 = vrot.lane.b32.xlu0 %v713, 103
        %v722 = vpop.permute.xlu0 %721
        %723 = vrot.lane.b32.xlu0 %v714, 103
        %v724 = vpop.permute.xlu0 %723
        %725 = vrot.lane.b32.xlu0 %v715, 103
        %v726 = vpop.permute.xlu0 %725
        %727 = vrot.lane.b32.xlu0 %v716, 103
        %v728 = vpop.permute.xlu0 %727
        %vm729 = vcmask 842752
        %v730 = vsel %vm729, %v722, %v724
        %v731 = vsel %vm729, %v724, %v726
        %v732 = vsel %vm729, %v726, %v728
        %v734 = vsel %vm260, %v706, 0
        %v737 = vand.u32 %v730, %v267
        %v740 = vand.u32 %v731, %v267
        %v743 = vand.u32 %v732, %v267
        %745 = vmatprep.subr.bf16.mxu0 %v740
        %746 = vmatpush1.bf16.msra.mxu0 %v737
        %747 = vmatprep.subr.bf16.mxu0 0
        %748 = vmatpush1.bf16.msra.mxu0 0
        %749 = vmatprep.subr.bf16.mxu0 0
        %750 = vmatpush1.bf16.msra.mxu0 0
        %751 = vmatprep.subr.bf16.mxu0 0
        %752 = vmatpush1.bf16.msra.mxu0 0
        %753 = vmatprep.subr.bf16.mxu0 0
        %754 = vmatpush1.bf16.msra.mxu0 0
        %755 = vmatprep.subr.bf16.mxu0 0
        %756 = vmatpush1.bf16.msra.mxu0 0
        %757 = vmatprep.subr.bf16.mxu0 0
        %758 = vmatpush1.bf16.msra.mxu0 0
        %759 = vmatprep.subr.bf16.mxu0 0
        %760 = vmatpush1.bf16.msra.mxu0 0
        %761 = vmatprep.subr.bf16.mxu0 0
        %762 = vmatpush1.bf16.msra.mxu0 0
        %763 = vmatprep.subr.bf16.mxu0 0
        %764 = vmatpush1.bf16.msra.mxu0 0
        %765 = vmatprep.subr.bf16.mxu0 0
        %766 = vmatpush1.bf16.msra.mxu0 0
        %767 = vmatprep.subr.bf16.mxu0 0
        %768 = vmatpush1.bf16.msra.mxu0 0
        %769 = vmatprep.subr.bf16.mxu0 0
        %770 = vmatpush1.bf16.msra.mxu0 0
        %771 = vmatprep.subr.bf16.mxu0 0
        %772 = vmatpush1.bf16.msra.mxu0 0
        %773 = vmatprep.subr.bf16.mxu0 0
        %774 = vmatpush1.bf16.msra.mxu0 0
        %775 = vmatprep.subr.bf16.mxu0 0
        %776 = vmatpush1.bf16.msra.mxu0 0
        %777 = vmatprep.mubr.bf16.mxu0 0
        %778 = vmatmul.mubr.bf16.gmra.mrb[0].mxu0 %v734
        %v779 = vpop.f32.mrb[0].mxu0
        %v780 = vadd.f32 0.0, %v779
        %v781 = vpop.f32.mrb[0].mxu0
        %v782 = vadd.f32 0.0, %v781
        %v783 = vpop.f32.mrb[0].mxu0
        %v784 = vpop.f32.mrb[0].mxu0
        %785 = vdwg.mxu0
        %786 = vmatprep.subr.bf16.mxu0 0
        %787 = vmatpush1.bf16.msra.mxu0 %v743
        %788 = vmatprep.subr.bf16.mxu0 0
        %789 = vmatpush1.bf16.msra.mxu0 0
        %790 = vmatprep.subr.bf16.mxu0 0
        %791 = vmatpush1.bf16.msra.mxu0 0
        %792 = vmatprep.subr.bf16.mxu0 0
        %793 = vmatpush1.bf16.msra.mxu0 0
        %794 = vmatprep.subr.bf16.mxu0 0
        %795 = vmatpush1.bf16.msra.mxu0 0
        %796 = vmatprep.subr.bf16.mxu0 0
        %797 = vmatpush1.bf16.msra.mxu0 0
        %798 = vmatprep.subr.bf16.mxu0 0
        %799 = vmatpush1.bf16.msra.mxu0 0
        %800 = vmatprep.subr.bf16.mxu0 0
        %801 = vmatpush1.bf16.msra.mxu0 0
        %802 = vmatprep.subr.bf16.mxu0 0
        %803 = vmatpush1.bf16.msra.mxu0 0
        %804 = vmatprep.subr.bf16.mxu0 0
        %805 = vmatpush1.bf16.msra.mxu0 0
        %806 = vmatprep.subr.bf16.mxu0 0
        %807 = vmatpush1.bf16.msra.mxu0 0
        %808 = vmatprep.subr.bf16.mxu0 0
        %809 = vmatpush1.bf16.msra.mxu0 0
        %810 = vmatprep.subr.bf16.mxu0 0
        %811 = vmatpush1.bf16.msra.mxu0 0
        %812 = vmatprep.subr.bf16.mxu0 0
        %813 = vmatpush1.bf16.msra.mxu0 0
        %814 = vmatprep.subr.bf16.mxu0 0
        %815 = vmatpush1.bf16.msra.mxu0 0
        %816 = vmatprep.subr.bf16.mxu0 0
        %817 = vmatpush1.bf16.msra.mxu0 0
        %818 = vmatprep.mubr.bf16.mxu0 0
        %819 = vmatmul.mubr.bf16.gmra.mrb[0].mxu0 %v734
        %v820 = vpop.f32.mrb[0].mxu0
        %v821 = vadd.f32 0.0, %v820
        %v822 = vpop.f32.mrb[0].mxu0
        %v823 = vpop.f32.mrb[0].mxu0
        %v824 = vpop.f32.mrb[0].mxu0
        %825 = vdwg.mxu0
        %v826 = vadd.f32 %v700, %v780
        %v827 = vadd.f32 %v701, %v782
        %v828 = vadd.f32 %v702, %v821
        %v829 = vld [vmem:[#allocation2] sm:$0x77]
        %v830 = vld [vmem:[#allocation2 + $0x8] sm:$0x77]
        %s831 = scalar_lea.vmem %s2, 20
        %v832 = vld [vmem:[%s831] sm:$0xf]
        %v835 = vcombine.high %v829, %v829
        %v836 = vcombine.high %v830, %v830
        %v839 = vpack.c.bf16 %v829, %v829
        %v840 = vpack.c.bf16 %v835, %v835
        %v841 = vpack.c.bf16 %v830, %v830
        %v842 = vpack.c.bf16 %v836, %v836
        %847 = vrot.lane.b32.xlu0 %v839, 102
        %v848 = vpop.permute.xlu0 %847
        %849 = vrot.lane.b32.xlu0 %v840, 102
        %v850 = vpop.permute.xlu0 %849
        %851 = vrot.lane.b32.xlu0 %v841, 102
        %v852 = vpop.permute.xlu0 %851
        %853 = vrot.lane.b32.xlu0 %v842, 102
        %v854 = vpop.permute.xlu0 %853
        %vm855 = vcmask 834560
        %v856 = vsel %vm855, %v848, %v850
        %v857 = vsel %vm855, %v850, %v852
        %v858 = vsel %vm855, %v852, %v854
        %v860 = vsel %vm260, %v832, 0
        %v863 = vand.u32 %v856, %v267
        %v866 = vand.u32 %v857, %v267
        %v869 = vand.u32 %v858, %v267
        %871 = vmatprep.subr.bf16.mxu0 %v866
        %872 = vmatpush1.bf16.msra.mxu0 %v863
        %873 = vmatprep.subr.bf16.mxu0 0
        %874 = vmatpush1.bf16.msra.mxu0 0
        %875 = vmatprep.subr.bf16.mxu0 0
        %876 = vmatpush1.bf16.msra.mxu0 0
        %877 = vmatprep.subr.bf16.mxu0 0
        %878 = vmatpush1.bf16.msra.mxu0 0
        %879 = vmatprep.subr.bf16.mxu0 0
        %880 = vmatpush1.bf16.msra.mxu0 0
        %881 = vmatprep.subr.bf16.mxu0 0
        %882 = vmatpush1.bf16.msra.mxu0 0
        %883 = vmatprep.subr.bf16.mxu0 0
        %884 = vmatpush1.bf16.msra.mxu0 0
        %885 = vmatprep.subr.bf16.mxu0 0
        %886 = vmatpush1.bf16.msra.mxu0 0
        %887 = vmatprep.subr.bf16.mxu0 0
        %888 = vmatpush1.bf16.msra.mxu0 0
        %889 = vmatprep.subr.bf16.mxu0 0
        %890 = vmatpush1.bf16.msra.mxu0 0
        %891 = vmatprep.subr.bf16.mxu0 0
        %892 = vmatpush1.bf16.msra.mxu0 0
        %893 = vmatprep.subr.bf16.mxu0 0
        %894 = vmatpush1.bf16.msra.mxu0 0
        %895 = vmatprep.subr.bf16.mxu0 0
        %896 = vmatpush1.bf16.msra.mxu0 0
        %897 = vmatprep.subr.bf16.mxu0 0
        %898 = vmatpush1.bf16.msra.mxu0 0
        %899 = vmatprep.subr.bf16.mxu0 0
        %900 = vmatpush1.bf16.msra.mxu0 0
        %901 = vmatprep.subr.bf16.mxu0 0
        %902 = vmatpush1.bf16.msra.mxu0 0
        %903 = vmatprep.mubr.bf16.mxu0 0
        %904 = vmatmul.mubr.bf16.gmra.mrb[0].mxu0 %v860
        %v905 = vpop.f32.mrb[0].mxu0
        %v906 = vadd.f32 0.0, %v905
        %v907 = vpop.f32.mrb[0].mxu0
        %v908 = vadd.f32 0.0, %v907
        %v909 = vpop.f32.mrb[0].mxu0
        %v910 = vpop.f32.mrb[0].mxu0
        %911 = vdwg.mxu0
        %912 = vmatprep.subr.bf16.mxu0 0
        %913 = vmatpush1.bf16.msra.mxu0 %v869
        %914 = vmatprep.subr.bf16.mxu0 0
        %915 = vmatpush1.bf16.msra.mxu0 0
        %916 = vmatprep.subr.bf16.mxu0 0
        %917 = vmatpush1.bf16.msra.mxu0 0
        %918 = vmatprep.subr.bf16.mxu0 0
        %919 = vmatpush1.bf16.msra.mxu0 0
        %920 = vmatprep.subr.bf16.mxu0 0
        %921 = vmatpush1.bf16.msra.mxu0 0
        %922 = vmatprep.subr.bf16.mxu0 0
        %923 = vmatpush1.bf16.msra.mxu0 0
        %924 = vmatprep.subr.bf16.mxu0 0
        %925 = vmatpush1.bf16.msra.mxu0 0
        %926 = vmatprep.subr.bf16.mxu0 0
        %927 = vmatpush1.bf16.msra.mxu0 0
        %928 = vmatprep.subr.bf16.mxu0 0
        %929 = vmatpush1.bf16.msra.mxu0 0
        %930 = vmatprep.subr.bf16.mxu0 0
        %931 = vmatpush1.bf16.msra.mxu0 0
        %932 = vmatprep.subr.bf16.mxu0 0
        %933 = vmatpush1.bf16.msra.mxu0 0
        %934 = vmatprep.subr.bf16.mxu0 0
        %935 = vmatpush1.bf16.msra.mxu0 0
        %936 = vmatprep.subr.bf16.mxu0 0
        %937 = vmatpush1.bf16.msra.mxu0 0
        %938 = vmatprep.subr.bf16.mxu0 0
        %939 = vmatpush1.bf16.msra.mxu0 0
        %940 = vmatprep.subr.bf16.mxu0 0
        %941 = vmatpush1.bf16.msra.mxu0 0
        %942 = vmatprep.subr.bf16.mxu0 0
        %943 = vmatpush1.bf16.msra.mxu0 0
        %944 = vmatprep.mubr.bf16.mxu0 0
        %945 = vmatmul.mubr.bf16.gmra.mrb[0].mxu0 %v860
        %v946 = vpop.f32.mrb[0].mxu0
        %v947 = vadd.f32 0.0, %v946
        %v948 = vpop.f32.mrb[0].mxu0
        %v949 = vpop.f32.mrb[0].mxu0
        %v950 = vpop.f32.mrb[0].mxu0
        %951 = vdwg.mxu0
        %v952 = vadd.f32 %v826, %v906
        %v953 = vadd.f32 %v827, %v908
        %v954 = vadd.f32 %v828, %v947
        %v955 = vld [vmem:[#allocation2] sm:$0x77]
        %v956 = vld [vmem:[#allocation2 + $0x8] sm:$0x77]
        %s957 = scalar_lea.vmem %s2, 24
        %v958 = vld [vmem:[%s957] sm:$0xf]
        %v961 = vcombine.high %v955, %v955
        %v962 = vcombine.high %v956, %v956
        %v965 = vpack.c.bf16 %v955, %v955
        %v966 = vpack.c.bf16 %v961, %v961
        %v967 = vpack.c.bf16 %v956, %v956
        %v968 = vpack.c.bf16 %v962, %v962
        %973 = vrot.lane.b32.xlu0 %v965, 80
        %v974 = vpop.permute.xlu0 %973
        %975 = vrot.lane.b32.xlu0 %v966, 80
        %v976 = vpop.permute.xlu0 %975
        %977 = vrot.lane.b32.xlu0 %v967, 80
        %v978 = vpop.permute.xlu0 %977
        %979 = vrot.lane.b32.xlu0 %v968, 80
        %v980 = vpop.permute.xlu0 %979
        %vm981 = vcmask 654336
        %v982 = vsel %vm981, %v974, %v976
        %v983 = vsel %vm981, %v976, %v978
        %v984 = vsel %vm981, %v978, %v980
        %v986 = vsel %vm260, %v958, 0
        %v989 = vand.u32 %v982, %v267
        %v992 = vand.u32 %v983, %v267
        %v995 = vand.u32 %v984, %v267
        %997 = vmatprep.subr.bf16.mxu0 %v992
        %998 = vmatpush1.bf16.msra.mxu0 %v989
        %999 = vmatprep.subr.bf16.mxu0 0
        %1000 = vmatpush1.bf16.msra.mxu0 0
        %1001 = vmatprep.subr.bf16.mxu0 0
        %1002 = vmatpush1.bf16.msra.mxu0 0
        %1003 = vmatprep.subr.bf16.mxu0 0
        %1004 = vmatpush1.bf16.msra.mxu0 0
        %1005 = vmatprep.subr.bf16.mxu0 0
        %1006 = vmatpush1.bf16.msra.mxu0 0
        %1007 = vmatprep.subr.bf16.mxu0 0
        %1008 = vmatpush1.bf16.msra.mxu0 0
        %1009 = vmatprep.subr.bf16.mxu0 0
        %1010 = vmatpush1.bf16.msra.mxu0 0
        %1011 = vmatprep.subr.bf16.mxu0 0
        %1012 = vmatpush1.bf16.msra.mxu0 0
        %1013 = vmatprep.subr.bf16.mxu0 0
        %1014 = vmatpush1.bf16.msra.mxu0 0
        %1015 = vmatprep.subr.bf16.mxu0 0
        %1016 = vmatpush1.bf16.msra.mxu0 0
        %1017 = vmatprep.subr.bf16.mxu0 0
        %1018 = vmatpush1.bf16.msra.mxu0 0
        %1019 = vmatprep.subr.bf16.mxu0 0
        %1020 = vmatpush1.bf16.msra.mxu0 0
        %1021 = vmatprep.subr.bf16.mxu0 0
        %1022 = vmatpush1.bf16.msra.mxu0 0
        %1023 = vmatprep.subr.bf16.mxu0 0
        %1024 = vmatpush1.bf16.msra.mxu0 0
        %1025 = vmatprep.subr.bf16.mxu0 0
        %1026 = vmatpush1.bf16.msra.mxu0 0
        %1027 = vmatprep.subr.bf16.mxu0 0
        %1028 = vmatpush1.bf16.msra.mxu0 0
        %1029 = vmatprep.mubr.bf16.mxu0 0
        %1030 = vmatmul.mubr.bf16.gmra.mrb[0].mxu0 %v986
        %v1031 = vpop.f32.mrb[0].mxu0
        %v1032 = vadd.f32 0.0, %v1031
        %v1033 = vpop.f32.mrb[0].mxu0
        %v1034 = vadd.f32 0.0, %v1033
        %v1035 = vpop.f32.mrb[0].mxu0
        %v1036 = vpop.f32.mrb[0].mxu0
        %1037 = vdwg.mxu0
        %1038 = vmatprep.subr.bf16.mxu0 0
        %1039 = vmatpush1.bf16.msra.mxu0 %v995
        %1040 = vmatprep.subr.bf16.mxu0 0
        %1041 = vmatpush1.bf16.msra.mxu0 0
        %1042 = vmatprep.subr.bf16.mxu0 0
        %1043 = vmatpush1.bf16.msra.mxu0 0
        %1044 = vmatprep.subr.bf16.mxu0 0
        %1045 = vmatpush1.bf16.msra.mxu0 0
        %1046 = vmatprep.subr.bf16.mxu0 0
        %1047 = vmatpush1.bf16.msra.mxu0 0
        %1048 = vmatprep.subr.bf16.mxu0 0
        %1049 = vmatpush1.bf16.msra.mxu0 0
        %1050 = vmatprep.subr.bf16.mxu0 0
        %1051 = vmatpush1.bf16.msra.mxu0 0
        %1052 = vmatprep.subr.bf16.mxu0 0
        %1053 = vmatpush1.bf16.msra.mxu0 0
        %1054 = vmatprep.subr.bf16.mxu0 0
        %1055 = vmatpush1.bf16.msra.mxu0 0
        %1056 = vmatprep.subr.bf16.mxu0 0
        %1057 = vmatpush1.bf16.msra.mxu0 0
        %1058 = vmatprep.subr.bf16.mxu0 0
        %1059 = vmatpush1.bf16.msra.mxu0 0
        %1060 = vmatprep.subr.bf16.mxu0 0
        %1061 = vmatpush1.bf16.msra.mxu0 0
        %1062 = vmatprep.subr.bf16.mxu0 0
        %1063 = vmatpush1.bf16.msra.mxu0 0
        %1064 = vmatprep.subr.bf16.mxu0 0
        %1065 = vmatpush1.bf16.msra.mxu0 0
        %1066 = vmatprep.subr.bf16.mxu0 0
        %1067 = vmatpush1.bf16.msra.mxu0 0
        %1068 = vmatprep.subr.bf16.mxu0 0
        %1069 = vmatpush1.bf16.msra.mxu0 0
        %1070 = vmatprep.mubr.bf16.mxu0 0
        %1071 = vmatmul.mubr.bf16.gmra.mrb[0].mxu0 %v986
        %v1072 = vpop.f32.mrb[0].mxu0
        %v1073 = vadd.f32 0.0, %v1072
        %v1074 = vpop.f32.mrb[0].mxu0
        %v1075 = vpop.f32.mrb[0].mxu0
        %v1076 = vpop.f32.mrb[0].mxu0
        %1077 = vdwg.mxu0
        %v1078 = vadd.f32 %v952, %v1032
        %v1079 = vadd.f32 %v953, %v1034
        %v1080 = vadd.f32 %v954, %v1073
        %v1081 = vld [vmem:[#allocation2] sm:$0x77]
        %v1082 = vld [vmem:[#allocation2 + $0x8] sm:$0x77]
        %s1083 = scalar_lea.vmem %s2, 28
        %v1084 = vld [vmem:[%s1083] sm:$0xf]
        %v1087 = vcombine.high %v1081, %v1081
        %v1088 = vcombine.high %v1082, %v1082
        %v1091 = vpack.c.bf16 %v1081, %v1081
        %v1092 = vpack.c.bf16 %v1087, %v1087
        %v1093 = vpack.c.bf16 %v1082, %v1082
        %v1094 = vpack.c.bf16 %v1088, %v1088
        %1099 = vrot.lane.b32.xlu0 %v1091, 79
        %v1100 = vpop.permute.xlu0 %1099
        %1101 = vrot.lane.b32.xlu0 %v1092, 79
        %v1102 = vpop.permute.xlu0 %1101
        %1103 = vrot.lane.b32.xlu0 %v1093, 79
        %v1104 = vpop.permute.xlu0 %1103
        %1105 = vrot.lane.b32.xlu0 %v1094, 79
        %v1106 = vpop.permute.xlu0 %1105
        %vm1107 = vcmask 646144
        %v1108 = vsel %vm1107, %v1100, %v1102
        %v1109 = vsel %vm1107, %v1102, %v1104
        %v1110 = vsel %vm1107, %v1104, %v1106
        %v1112 = vsel %vm260, %v1084, 0
        %v1115 = vand.u32 %v1108, %v267
        %v1118 = vand.u32 %v1109, %v267
        %v1121 = vand.u32 %v1110, %v267
        %1123 = vmatprep.subr.bf16.mxu0 %v1118
        %1124 = vmatpush1.bf16.msra.mxu0 %v1115
        %1125 = vmatprep.subr.bf16.mxu0 0
        %1126 = vmatpush1.bf16.msra.mxu0 0
        %1127 = vmatprep.subr.bf16.mxu0 0
        %1128 = vmatpush1.bf16.msra.mxu0 0
        %1129 = vmatprep.subr.bf16.mxu0 0
        %1130 = vmatpush1.bf16.msra.mxu0 0
        %1131 = vmatprep.subr.bf16.mxu0 0
        %1132 = vmatpush1.bf16.msra.mxu0 0
        %1133 = vmatprep.subr.bf16.mxu0 0
        %1134 = vmatpush1.bf16.msra.mxu0 0
        %1135 = vmatprep.subr.bf16.mxu0 0
        %1136 = vmatpush1.bf16.msra.mxu0 0
        %1137 = vmatprep.subr.bf16.mxu0 0
        %1138 = vmatpush1.bf16.msra.mxu0 0
        %1139 = vmatprep.subr.bf16.mxu0 0
        %1140 = vmatpush1.bf16.msra.mxu0 0
        %1141 = vmatprep.subr.bf16.mxu0 0
        %1142 = vmatpush1.bf16.msra.mxu0 0
        %1143 = vmatprep.subr.bf16.mxu0 0
        %1144 = vmatpush1.bf16.msra.mxu0 0
        %1145 = vmatprep.subr.bf16.mxu0 0
        %1146 = vmatpush1.bf16.msra.mxu0 0
        %1147 = vmatprep.subr.bf16.mxu0 0
        %1148 = vmatpush1.bf16.msra.mxu0 0
        %1149 = vmatprep.subr.bf16.mxu0 0
        %1150 = vmatpush1.bf16.msra.mxu0 0
        %1151 = vmatprep.subr.bf16.mxu0 0
        %1152 = vmatpush1.bf16.msra.mxu0 0
        %1153 = vmatprep.subr.bf16.mxu0 0
        %1154 = vmatpush1.bf16.msra.mxu0 0
        %1155 = vmatprep.mubr.bf16.mxu0 0
        %1156 = vmatmul.mubr.bf16.gmra.mrb[0].mxu0 %v1112
        %v1157 = vpop.f32.mrb[0].mxu0
        %v1158 = vadd.f32 0.0, %v1157
        %v1159 = vpop.f32.mrb[0].mxu0
        %v1160 = vadd.f32 0.0, %v1159
        %v1161 = vpop.f32.mrb[0].mxu0
        %v1162 = vpop.f32.mrb[0].mxu0
        %1163 = vdwg.mxu0
        %1164 = vmatprep.subr.bf16.mxu0 0
        %1165 = vmatpush1.bf16.msra.mxu0 %v1121
        %1166 = vmatprep.subr.bf16.mxu0 0
        %1167 = vmatpush1.bf16.msra.mxu0 0
        %1168 = vmatprep.subr.bf16.mxu0 0
        %1169 = vmatpush1.bf16.msra.mxu0 0
        %1170 = vmatprep.subr.bf16.mxu0 0
        %1171 = vmatpush1.bf16.msra.mxu0 0
        %1172 = vmatprep.subr.bf16.mxu0 0
        %1173 = vmatpush1.bf16.msra.mxu0 0
        %1174 = vmatprep.subr.bf16.mxu0 0
        %1175 = vmatpush1.bf16.msra.mxu0 0
        %1176 = vmatprep.subr.bf16.mxu0 0
        %1177 = vmatpush1.bf16.msra.mxu0 0
        %1178 = vmatprep.subr.bf16.mxu0 0
        %1179 = vmatpush1.bf16.msra.mxu0 0
        %1180 = vmatprep.subr.bf16.mxu0 0
        %1181 = vmatpush1.bf16.msra.mxu0 0
        %1182 = vmatprep.subr.bf16.mxu0 0
        %1183 = vmatpush1.bf16.msra.mxu0 0
        %1184 = vmatprep.subr.bf16.mxu0 0
        %1185 = vmatpush1.bf16.msra.mxu0 0
        %1186 = vmatprep.subr.bf16.mxu0 0
        %1187 = vmatpush1.bf16.msra.mxu0 0
        %1188 = vmatprep.subr.bf16.mxu0 0
        %1189 = vmatpush1.bf16.msra.mxu0 0
        %1190 = vmatprep.subr.bf16.mxu0 0
        %1191 = vmatpush1.bf16.msra.mxu0 0
        %1192 = vmatprep.subr.bf16.mxu0 0
        %1193 = vmatpush1.bf16.msra.mxu0 0
        %1194 = vmatprep.subr.bf16.mxu0 0
        %1195 = vmatpush1.bf16.msra.mxu0 0
        %1196 = vmatprep.mubr.bf16.mxu0 0
        %1197 = vmatmul.mubr.bf16.gmra.mrb[0].mxu0 %v1112
        %v1198 = vpop.f32.mrb[0].mxu0
        %v1199 = vadd.f32 0.0, %v1198
        %v1200 = vpop.f32.mrb[0].mxu0
        %v1201 = vpop.f32.mrb[0].mxu0
        %v1202 = vpop.f32.mrb[0].mxu0
        %1203 = vdwg.mxu0
        %v1204 = vadd.f32 %v1078, %v1158
        %v1205 = vadd.f32 %v1079, %v1160
        %v1206 = vadd.f32 %v1080, %v1199
        %v1207 = vld [vmem:[#allocation2] sm:$0x77]
        %v1208 = vld [vmem:[#allocation2 + $0x8] sm:$0x77]
        %s1209 = scalar_lea.vmem %s2, 32
        %v1210 = vld [vmem:[%s1209] sm:$0xf]
        %v1213 = vcombine.high %v1207, %v1207
        %v1214 = vcombine.high %v1208, %v1208
        %v1217 = vpack.c.bf16 %v1207, %v1207
        %v1218 = vpack.c.bf16 %v1213, %v1213
        %v1219 = vpack.c.bf16 %v1208, %v1208
        %v1220 = vpack.c.bf16 %v1214, %v1214
        %1225 = vrot.lane.b32.xlu0 %v1217, 78
        %v1226 = vpop.permute.xlu0 %1225
        %1227 = vrot.lane.b32.xlu0 %v1218, 78
        %v1228 = vpop.permute.xlu0 %1227
        %1229 = vrot.lane.b32.xlu0 %v1219, 78
        %v1230 = vpop.permute.xlu0 %1229
        %1231 = vrot.lane.b32.xlu0 %v1220, 78
        %v1232 = vpop.permute.xlu0 %1231
        %vm1233 = vcmask 637952
        %v1234 = vsel %vm1233, %v1226, %v1228
        %v1235 = vsel %vm1233, %v1228, %v1230
        %v1236 = vsel %vm1233, %v1230, %v1232
        %v1238 = vsel %vm260, %v1210, 0
        %v1241 = vand.u32 %v1234, %v267
        %v1244 = vand.u32 %v1235, %v267
        %v1247 = vand.u32 %v1236, %v267
        %1249 = vmatprep.subr.bf16.mxu0 %v1244
        %1250 = vmatpush1.bf16.msra.mxu0 %v1241
        %1251 = vmatprep.subr.bf16.mxu0 0
        %1252 = vmatpush1.bf16.msra.mxu0 0
        %1253 = vmatprep.subr.bf16.mxu0 0
        %1254 = vmatpush1.bf16.msra.mxu0 0
        %1255 = vmatprep.subr.bf16.mxu0 0
        %1256 = vmatpush1.bf16.msra.mxu0 0
        %1257 = vmatprep.subr.bf16.mxu0 0
        %1258 = vmatpush1.bf16.msra.mxu0 0
        %1259 = vmatprep.subr.bf16.mxu0 0
        %1260 = vmatpush1.bf16.msra.mxu0 0
        %1261 = vmatprep.subr.bf16.mxu0 0
        %1262 = vmatpush1.bf16.msra.mxu0 0
        %1263 = vmatprep.subr.bf16.mxu0 0
        %1264 = vmatpush1.bf16.msra.mxu0 0
        %1265 = vmatprep.subr.bf16.mxu0 0
        %1266 = vmatpush1.bf16.msra.mxu0 0
        %1267 = vmatprep.subr.bf16.mxu0 0
        %1268 = vmatpush1.bf16.msra.mxu0 0
        %1269 = vmatprep.subr.bf16.mxu0 0
        %1270 = vmatpush1.bf16.msra.mxu0 0
        %1271 = vmatprep.subr.bf16.mxu0 0
        %1272 = vmatpush1.bf16.msra.mxu0 0
        %1273 = vmatprep.subr.bf16.mxu0 0
        %1274 = vmatpush1.bf16.msra.mxu0 0
        %1275 = vmatprep.subr.bf16.mxu0 0
        %1276 = vmatpush1.bf16.msra.mxu0 0
        %1277 = vmatprep.subr.bf16.mxu0 0
        %1278 = vmatpush1.bf16.msra.mxu0 0
        %1279 = vmatprep.subr.bf16.mxu0 0
        %1280 = vmatpush1.bf16.msra.mxu0 0
        %1281 = vmatprep.mubr.bf16.mxu0 0
        %1282 = vmatmul.mubr.bf16.gmra.mrb[0].mxu0 %v1238
        %v1283 = vpop.f32.mrb[0].mxu0
        %v1284 = vadd.f32 0.0, %v1283
        %v1285 = vpop.f32.mrb[0].mxu0
        %v1286 = vadd.f32 0.0, %v1285
        %v1287 = vpop.f32.mrb[0].mxu0
        %v1288 = vpop.f32.mrb[0].mxu0
        %1289 = vdwg.mxu0
        %1290 = vmatprep.subr.bf16.mxu0 0
        %1291 = vmatpush1.bf16.msra.mxu0 %v1247
        %1292 = vmatprep.subr.bf16.mxu0 0
        %1293 = vmatpush1.bf16.msra.mxu0 0
        %1294 = vmatprep.subr.bf16.mxu0 0
        %1295 = vmatpush1.bf16.msra.mxu0 0
        %1296 = vmatprep.subr.bf16.mxu0 0
        %1297 = vmatpush1.bf16.msra.mxu0 0
        %1298 = vmatprep.subr.bf16.mxu0 0
        %1299 = vmatpush1.bf16.msra.mxu0 0
        %1300 = vmatprep.subr.bf16.mxu0 0
        %1301 = vmatpush1.bf16.msra.mxu0 0
        %1302 = vmatprep.subr.bf16.mxu0 0
        %1303 = vmatpush1.bf16.msra.mxu0 0
        %1304 = vmatprep.subr.bf16.mxu0 0
        %1305 = vmatpush1.bf16.msra.mxu0 0
        %1306 = vmatprep.subr.bf16.mxu0 0
        %1307 = vmatpush1.bf16.msra.mxu0 0
        %1308 = vmatprep.subr.bf16.mxu0 0
        %1309 = vmatpush1.bf16.msra.mxu0 0
        %1310 = vmatprep.subr.bf16.mxu0 0
        %1311 = vmatpush1.bf16.msra.mxu0 0
        %1312 = vmatprep.subr.bf16.mxu0 0
        %1313 = vmatpush1.bf16.msra.mxu0 0
        %1314 = vmatprep.subr.bf16.mxu0 0
        %1315 = vmatpush1.bf16.msra.mxu0 0
        %1316 = vmatprep.subr.bf16.mxu0 0
        %1317 = vmatpush1.bf16.msra.mxu0 0
        %1318 = vmatprep.subr.bf16.mxu0 0
        %1319 = vmatpush1.bf16.msra.mxu0 0
        %1320 = vmatprep.subr.bf16.mxu0 0
        %1321 = vmatpush1.bf16.msra.mxu0 0
        %1322 = vmatprep.mubr.bf16.mxu0 0
        %1323 = vmatmul.mubr.bf16.gmra.mrb[0].mxu0 %v1238
        %v1324 = vpop.f32.mrb[0].mxu0
        %v1325 = vadd.f32 0.0, %v1324
        %v1326 = vpop.f32.mrb[0].mxu0
        %v1327 = vpop.f32.mrb[0].mxu0
        %v1328 = vpop.f32.mrb[0].mxu0
        %1329 = vdwg.mxu0
        %v1330 = vadd.f32 %v1204, %v1284
        %v1331 = vadd.f32 %v1205, %v1286
        %v1332 = vadd.f32 %v1206, %v1325
        %v1334 = vlaneseq
        %v1335 = vshrl.u32 %v1334, 7
        %v1336 = vsub.s32 0, %v1335
        %v1337 = vrot.slane %v197, %v1336
        %v1338 = vlaneseq
        %v1339 = vshrl.u32 %v1338, 7
        %v1340 = vsub.s32 1, %v1339
        %v1341 = vrot.slane %v197, %v1340
        %v1342 = vlaneseq
        %v1343 = vshrl.u32 %v1342, 7
        %v1344 = vsub.s32 2, %v1343
        %v1345 = vrot.slane %v197, %v1344
        %v1349 = vmul.f32 %v1330, %v1337
        %v1350 = vmul.f32 %v1331, %v1341
        %v1351 = vmul.f32 %v1332, %v1345
        %v1352 = vadd.f32 %v1349, %v1350
        %v1353 = vadd.f32 %v1352, %v1351
        %1354 = vadd.xlane.f32.xlu0 %v1353
        %v1355 = vpop.xlane.xlu0 %1354
        %v1356 = vmul.f32 %v1349, %v1330
        %v1357 = vmul.f32 %v1350, %v1331
        %v1358 = vmul.f32 %v1351, %v1332
        %v1359 = vadd.f32 %v1356, %v1357
        %v1360 = vadd.f32 %v1359, %v1358
        %1361 = vadd.xlane.f32.xlu0 %v1360
        %v1362 = vpop.xlane.xlu0 %1361
        %v1363 = vmul.f32 %v1355, 0.00390625
        %v1364 = vmul.f32 %v1362, 0.00390625
        %v1365 = vmul.f32 %v1363, %v1363
        %v1366 = vsub.f32 %v1364, %v1365
        %v1367 = vmax.f32 %v1366, 0.0
        %v1368 = vsub.f32 %v1330, %v1363
        %v1369 = vsub.f32 %v1331, %v1363
        %v1370 = vsub.f32 %v1332, %v1363
        %v1371 = vadd.f32 %v1367, 1e-05
        %v1372 = vrsqrt.pop %v1371
        %v1373 = vmul.f32 %v1368, %v1372
        %v1374 = vmul.f32 %v1369, %v1372
        %v1375 = vmul.f32 %v1370, %v1372
        %v1376 = vmax.f32 %v1373, 0.0
        %v1377 = vmax.f32 %v1374, 0.0
        %v1378 = vmax.f32 %v1375, 0.0
        %v1379 = vmul.f32 %v1376, %v1337
        %v1380 = vmul.f32 %v1377, %v1341
        %v1381 = vmul.f32 %v1378, %v1345
        %1382 = vst [vmem:[#allocation3] sm:$0xff] 0.0
        %1383 = vst [vmem:[#allocation3 + $0x8] sm:$0xff] 0.0
        %1384 = vst [vmem:[#allocation3 + $0x10] sm:$0xff] 0.0
        %vm1385 = vcmask 408576
        %1386 = vst.msk [vmem:[#allocation3 + $0x18] sm:$0xff] %vm1385, 0.0
        %1390 = vrot.lane.b32.xlu0 %v1379, 25
        %v1391 = vpop.permute.xlu0 %1390
        %1392 = vrot.lane.b32.xlu0 %v1380, 25
        %v1393 = vpop.permute.xlu0 %1392
        %1394 = vrot.lane.b32.xlu0 %v1381, 25
        %v1395 = vpop.permute.xlu0 %1394
        %v1396 = vsel %vm213, %v1391, %v1393
        %v1397 = vsel %vm213, %v1393, %v1395
        %vm1402 = vcmask 1047752
        %1403 = vst.msk [vmem:[#allocation3] sm:$0xff] %vm1402, %v1391
        %1404 = vst [vmem:[#allocation3 + $0x8] sm:$0xff] %v1396
        %1405 = vst [vmem:[#allocation3 + $0x10] sm:$0xff] %v1397
        %1406 = vst.msk [vmem:[#allocation3 + $0x18] sm:$0xff] %vm213, %v1395
        %v1407 = vld [vmem:[#allocation3] sm:$0xff]
        %v1408 = vld [vmem:[#allocation3 + $0x8] sm:$0xff]
        %v1409 = vld [vmem:[#allocation3 + $0x10] sm:$0xff]
        %v1410 = vld [vmem:[%s3] sm:$0xf]
        %v1411 = vpack.c.bf16 %v1407, %v1407
        %v1412 = vpack.c.bf16 %v1408, %v1408
        %v1413 = vpack.c.bf16 %v1409, %v1409
        %v1414 = vld [vmem:[#allocation3 + $0x18] sm:$0xff]
        %s1415 = scalar_lea.vmem %s3, 4
        %v1416 = vld [vmem:[%s1415] sm:$0xf]
        %v1417 = vpack.c.bf16 %v1414, %v1414
        %1422 = vrot.lane.b32.xlu0 %v1411, 127
        %v1423 = vpop.permute.xlu0 %1422
        %1424 = vrot.lane.b32.xlu0 %v1412, 127
        %v1425 = vpop.permute.xlu0 %1424
        %1426 = vrot.lane.b32.xlu0 %v1413, 127
        %v1427 = vpop.permute.xlu0 %1426
        %1428 = vrot.lane.b32.xlu0 %v1417, 127
        %v1429 = vpop.permute.xlu0 %1428
        %v1430 = vsel %vm256, %v1423, %v1425
        %v1431 = vsel %vm256, %v1425, %v1427
        %v1432 = vsel %vm256, %v1427, %v1429
        %vm1433 = vcmask 64512
        %v1435 = vsel %vm1433, %v1416, 0
        %v1438 = vsel %vm215, %v1430, 0
        %v1441 = vsel %vm215, %v1431, 0
        %v1444 = vsel %vm215, %v1432, 0
        %1446 = vmatprep.subr.bf16.mxu0 %v1441
        %1447 = vmatpush1.bf16.msra.mxu0 %v1438
        %1448 = vmatprep.subr.bf16.mxu0 0
        %1449 = vmatpush1.bf16.msra.mxu0 0
        %1450 = vmatprep.subr.bf16.mxu0 0
        %1451 = vmatpush1.bf16.msra.mxu0 0
        %1452 = vmatprep.subr.bf16.mxu0 0
        %1453 = vmatpush1.bf16.msra.mxu0 0
        %1454 = vmatprep.subr.bf16.mxu0 0
        %1455 = vmatpush1.bf16.msra.mxu0 0
        %1456 = vmatprep.subr.bf16.mxu0 0
        %1457 = vmatpush1.bf16.msra.mxu0 0
        %1458 = vmatprep.subr.bf16.mxu0 0
        %1459 = vmatpush1.bf16.msra.mxu0 0
        %1460 = vmatprep.subr.bf16.mxu0 0
        %1461 = vmatpush1.bf16.msra.mxu0 0
        %1462 = vmatprep.subr.bf16.mxu0 0
        %1463 = vmatpush1.bf16.msra.mxu0 0
        %1464 = vmatprep.subr.bf16.mxu0 0
        %1465 = vmatpush1.bf16.msra.mxu0 0
        %1466 = vmatprep.subr.bf16.mxu0 0
        %1467 = vmatpush1.bf16.msra.mxu0 0
        %1468 = vmatprep.subr.bf16.mxu0 0
        %1469 = vmatpush1.bf16.msra.mxu0 0
        %1470 = vmatprep.subr.bf16.mxu0 0
        %1471 = vmatpush1.bf16.msra.mxu0 0
        %1472 = vmatprep.subr.bf16.mxu0 0
        %1473 = vmatpush1.bf16.msra.mxu0 0
        %1474 = vmatprep.subr.bf16.mxu0 0
        %1475 = vmatpush1.bf16.msra.mxu0 0
        %1476 = vmatprep.subr.bf16.mxu0 0
        %1477 = vmatpush1.bf16.msra.mxu0 0
        %1478 = vmatprep.mubr.bf16.mxu0 0
        %1479 = vmatmul.mubr.bf16.gmra.mrb[0].mxu0 %v1435
        %v1480 = vpop.f32.mrb[0].mxu0
        %v1481 = vadd.f32 0.0, %v1480
        %v1482 = vpop.f32.mrb[0].mxu0
        %v1483 = vadd.f32 0.0, %v1482
        %v1484 = vpop.f32.mrb[0].mxu0
        %v1485 = vpop.f32.mrb[0].mxu0
        %1486 = vdwg.mxu0
        %1487 = vmatprep.subr.bf16.mxu0 0
        %1488 = vmatpush1.bf16.msra.mxu0 %v1444
        %1489 = vmatprep.subr.bf16.mxu0 0
        %1490 = vmatpush1.bf16.msra.mxu0 0
        %1491 = vmatprep.subr.bf16.mxu0 0
        %1492 = vmatpush1.bf16.msra.mxu0 0
        %1493 = vmatprep.subr.bf16.mxu0 0
        %1494 = vmatpush1.bf16.msra.mxu0 0
        %1495 = vmatprep.subr.bf16.mxu0 0
        %1496 = vmatpush1.bf16.msra.mxu0 0
        %1497 = vmatprep.subr.bf16.mxu0 0
        %1498 = vmatpush1.bf16.msra.mxu0 0
        %1499 = vmatprep.subr.bf16.mxu0 0
        %1500 = vmatpush1.bf16.msra.mxu0 0
        %1501 = vmatprep.subr.bf16.mxu0 0
        %1502 = vmatpush1.bf16.msra.mxu0 0
        %1503 = vmatprep.subr.bf16.mxu0 0
        %1504 = vmatpush1.bf16.msra.mxu0 0
        %1505 = vmatprep.subr.bf16.mxu0 0
        %1506 = vmatpush1.bf16.msra.mxu0 0
        %1507 = vmatprep.subr.bf16.mxu0 0
        %1508 = vmatpush1.bf16.msra.mxu0 0
        %1509 = vmatprep.subr.bf16.mxu0 0
        %1510 = vmatpush1.bf16.msra.mxu0 0
        %1511 = vmatprep.subr.bf16.mxu0 0
        %1512 = vmatpush1.bf16.msra.mxu0 0
        %1513 = vmatprep.subr.bf16.mxu0 0
        %1514 = vmatpush1.bf16.msra.mxu0 0
        %1515 = vmatprep.subr.bf16.mxu0 0
        %1516 = vmatpush1.bf16.msra.mxu0 0
        %1517 = vmatprep.subr.bf16.mxu0 0
        %1518 = vmatpush1.bf16.msra.mxu0 0
        %1519 = vmatprep.mubr.bf16.mxu0 0
        %1520 = vmatmul.mubr.bf16.gmra.mrb[0].mxu0 %v1435
        %v1521 = vpop.f32.mrb[0].mxu0
        %v1522 = vadd.f32 0.0, %v1521
        %v1523 = vpop.f32.mrb[0].mxu0
        %v1524 = vpop.f32.mrb[0].mxu0
        %v1525 = vpop.f32.mrb[0].mxu0
        %1526 = vdwg.mxu0
        %v1528 = vsel %vm1433, %v1410, 0
        %v1531 = vsel %vm215, %v1411, 0
        %v1534 = vsel %vm215, %v1412, 0
        %v1537 = vsel %vm215, %v1413, 0
        %1539 = vmatprep.subr.bf16.mxu0 %v1534
        %1540 = vmatpush1.bf16.msra.mxu0 %v1531
        %1541 = vmatprep.subr.bf16.mxu0 0
        %1542 = vmatpush1.bf16.msra.mxu0 0
        %1543 = vmatprep.subr.bf16.mxu0 0
        %1544 = vmatpush1.bf16.msra.mxu0 0
        %1545 = vmatprep.subr.bf16.mxu0 0
        %1546 = vmatpush1.bf16.msra.mxu0 0
        %1547 = vmatprep.subr.bf16.mxu0 0
        %1548 = vmatpush1.bf16.msra.mxu0 0
        %1549 = vmatprep.subr.bf16.mxu0 0
        %1550 = vmatpush1.bf16.msra.mxu0 0
        %1551 = vmatprep.subr.bf16.mxu0 0
        %1552 = vmatpush1.bf16.msra.mxu0 0
        %1553 = vmatprep.subr.bf16.mxu0 0
        %1554 = vmatpush1.bf16.msra.mxu0 0
        %1555 = vmatprep.subr.bf16.mxu0 0
        %1556 = vmatpush1.bf16.msra.mxu0 0
        %1557 = vmatprep.subr.bf16.mxu0 0
        %1558 = vmatpush1.bf16.msra.mxu0 0
        %1559 = vmatprep.subr.bf16.mxu0 0
        %1560 = vmatpush1.bf16.msra.mxu0 0
        %1561 = vmatprep.subr.bf16.mxu0 0
        %1562 = vmatpush1.bf16.msra.mxu0 0
        %1563 = vmatprep.subr.bf16.mxu0 0
        %1564 = vmatpush1.bf16.msra.mxu0 0
        %1565 = vmatprep.subr.bf16.mxu0 0
        %1566 = vmatpush1.bf16.msra.mxu0 0
        %1567 = vmatprep.subr.bf16.mxu0 0
        %1568 = vmatpush1.bf16.msra.mxu0 0
        %1569 = vmatprep.subr.bf16.mxu0 0
        %1570 = vmatpush1.bf16.msra.mxu0 0
        %1571 = vmatprep.mubr.bf16.mxu0 0
        %1572 = vmatmul.mubr.bf16.gmra.mrb[0].mxu0 %v1528
        %v1573 = vpop.f32.mrb[0].mxu0
        %v1574 = vadd.f32 %v1481, %v1573
        %v1575 = vpop.f32.mrb[0].mxu0
        %v1576 = vadd.f32 %v1483, %v1575
        %v1577 = vpop.f32.mrb[0].mxu0
        %v1578 = vpop.f32.mrb[0].mxu0
        %1579 = vdwg.mxu0
        %1580 = vmatprep.subr.bf16.mxu0 0
        %1581 = vmatpush1.bf16.msra.mxu0 %v1537
        %1582 = vmatprep.subr.bf16.mxu0 0
        %1583 = vmatpush1.bf16.msra.mxu0 0
        %1584 = vmatprep.subr.bf16.mxu0 0
        %1585 = vmatpush1.bf16.msra.mxu0 0
        %1586 = vmatprep.subr.bf16.mxu0 0
        %1587 = vmatpush1.bf16.msra.mxu0 0
        %1588 = vmatprep.subr.bf16.mxu0 0
        %1589 = vmatpush1.bf16.msra.mxu0 0
        %1590 = vmatprep.subr.bf16.mxu0 0
        %1591 = vmatpush1.bf16.msra.mxu0 0
        %1592 = vmatprep.subr.bf16.mxu0 0
        %1593 = vmatpush1.bf16.msra.mxu0 0
        %1594 = vmatprep.subr.bf16.mxu0 0
        %1595 = vmatpush1.bf16.msra.mxu0 0
        %1596 = vmatprep.subr.bf16.mxu0 0
        %1597 = vmatpush1.bf16.msra.mxu0 0
        %1598 = vmatprep.subr.bf16.mxu0 0
        %1599 = vmatpush1.bf16.msra.mxu0 0
        %1600 = vmatprep.subr.bf16.mxu0 0
        %1601 = vmatpush1.bf16.msra.mxu0 0
        %1602 = vmatprep.subr.bf16.mxu0 0
        %1603 = vmatpush1.bf16.msra.mxu0 0
        %1604 = vmatprep.subr.bf16.mxu0 0
        %1605 = vmatpush1.bf16.msra.mxu0 0
        %1606 = vmatprep.subr.bf16.mxu0 0
        %1607 = vmatpush1.bf16.msra.mxu0 0
        %1608 = vmatprep.subr.bf16.mxu0 0
        %1609 = vmatpush1.bf16.msra.mxu0 0
        %1610 = vmatprep.subr.bf16.mxu0 0
        %1611 = vmatpush1.bf16.msra.mxu0 0
        %1612 = vmatprep.mubr.bf16.mxu0 0
        %1613 = vmatmul.mubr.bf16.gmra.mrb[0].mxu0 %v1528
        %v1614 = vpop.f32.mrb[0].mxu0
        %v1615 = vadd.f32 %v1522, %v1614
        %v1616 = vpop.f32.mrb[0].mxu0
        %v1617 = vpop.f32.mrb[0].mxu0
        %v1618 = vpop.f32.mrb[0].mxu0
        %1619 = vdwg.mxu0
        %s1620 = scalar_lea.vmem %s3, 8
        %v1621 = vld [vmem:[%s1620] sm:$0xf]
        %1622 = vrot.lane.b32.xlu0 %v1411, 126
        %v1623 = vpop.permute.xlu0 %1622
        %1624 = vrot.lane.b32.xlu0 %v1412, 126
        %v1625 = vpop.permute.xlu0 %1624
        %1626 = vrot.lane.b32.xlu0 %v1413, 126
        %v1627 = vpop.permute.xlu0 %1626
        %1628 = vrot.lane.b32.xlu0 %v1417, 126
        %v1629 = vpop.permute.xlu0 %1628
        %v1630 = vsel %vm477, %v1623, %v1625
        %v1631 = vsel %vm477, %v1625, %v1627
        %v1632 = vsel %vm477, %v1627, %v1629
        %v1634 = vsel %vm1433, %v1621, 0
        %v1637 = vsel %vm215, %v1630, 0
        %v1640 = vsel %vm215, %v1631, 0
        %v1643 = vsel %vm215, %v1632, 0
        %1645 = vmatprep.subr.bf16.mxu0 %v1640
        %1646 = vmatpush1.bf16.msra.mxu0 %v1637
        %1647 = vmatprep.subr.bf16.mxu0 0
        %1648 = vmatpush1.bf16.msra.mxu0 0
        %1649 = vmatprep.subr.bf16.mxu0 0
        %1650 = vmatpush1.bf16.msra.mxu0 0
        %1651 = vmatprep.subr.bf16.mxu0 0
        %1652 = vmatpush1.bf16.msra.mxu0 0
        %1653 = vmatprep.subr.bf16.mxu0 0
        %1654 = vmatpush1.bf16.msra.mxu0 0
        %1655 = vmatprep.subr.bf16.mxu0 0
        %1656 = vmatpush1.bf16.msra.mxu0 0
        %1657 = vmatprep.subr.bf16.mxu0 0
        %1658 = vmatpush1.bf16.msra.mxu0 0
        %1659 = vmatprep.subr.bf16.mxu0 0
        %1660 = vmatpush1.bf16.msra.mxu0 0
        %1661 = vmatprep.subr.bf16.mxu0 0
        %1662 = vmatpush1.bf16.msra.mxu0 0
        %1663 = vmatprep.subr.bf16.mxu0 0
        %1664 = vmatpush1.bf16.msra.mxu0 0
        %1665 = vmatprep.subr.bf16.mxu0 0
        %1666 = vmatpush1.bf16.msra.mxu0 0
        %1667 = vmatprep.subr.bf16.mxu0 0
        %1668 = vmatpush1.bf16.msra.mxu0 0
        %1669 = vmatprep.subr.bf16.mxu0 0
        %1670 = vmatpush1.bf16.msra.mxu0 0
        %1671 = vmatprep.subr.bf16.mxu0 0
        %1672 = vmatpush1.bf16.msra.mxu0 0
        %1673 = vmatprep.subr.bf16.mxu0 0
        %1674 = vmatpush1.bf16.msra.mxu0 0
        %1675 = vmatprep.subr.bf16.mxu0 0
        %1676 = vmatpush1.bf16.msra.mxu0 0
        %1677 = vmatprep.mubr.bf16.mxu0 0
        %1678 = vmatmul.mubr.bf16.gmra.mrb[0].mxu0 %v1634
        %v1679 = vpop.f32.mrb[0].mxu0
        %v1680 = vadd.f32 0.0, %v1679
        %v1681 = vpop.f32.mrb[0].mxu0
        %v1682 = vadd.f32 0.0, %v1681
        %v1683 = vpop.f32.mrb[0].mxu0
        %v1684 = vpop.f32.mrb[0].mxu0
        %1685 = vdwg.mxu0
        %1686 = vmatprep.subr.bf16.mxu0 0
        %1687 = vmatpush1.bf16.msra.mxu0 %v1643
        %1688 = vmatprep.subr.bf16.mxu0 0
        %1689 = vmatpush1.bf16.msra.mxu0 0
        %1690 = vmatprep.subr.bf16.mxu0 0
        %1691 = vmatpush1.bf16.msra.mxu0 0
        %1692 = vmatprep.subr.bf16.mxu0 0
        %1693 = vmatpush1.bf16.msra.mxu0 0
        %1694 = vmatprep.subr.bf16.mxu0 0
        %1695 = vmatpush1.bf16.msra.mxu0 0
        %1696 = vmatprep.subr.bf16.mxu0 0
        %1697 = vmatpush1.bf16.msra.mxu0 0
        %1698 = vmatprep.subr.bf16.mxu0 0
        %1699 = vmatpush1.bf16.msra.mxu0 0
        %1700 = vmatprep.subr.bf16.mxu0 0
        %1701 = vmatpush1.bf16.msra.mxu0 0
        %1702 = vmatprep.subr.bf16.mxu0 0
        %1703 = vmatpush1.bf16.msra.mxu0 0
        %1704 = vmatprep.subr.bf16.mxu0 0
        %1705 = vmatpush1.bf16.msra.mxu0 0
        %1706 = vmatprep.subr.bf16.mxu0 0
        %1707 = vmatpush1.bf16.msra.mxu0 0
        %1708 = vmatprep.subr.bf16.mxu0 0
        %1709 = vmatpush1.bf16.msra.mxu0 0
        %1710 = vmatprep.subr.bf16.mxu0 0
        %1711 = vmatpush1.bf16.msra.mxu0 0
        %1712 = vmatprep.subr.bf16.mxu0 0
        %1713 = vmatpush1.bf16.msra.mxu0 0
        %1714 = vmatprep.subr.bf16.mxu0 0
        %1715 = vmatpush1.bf16.msra.mxu0 0
        %1716 = vmatprep.subr.bf16.mxu0 0
        %1717 = vmatpush1.bf16.msra.mxu0 0
        %1718 = vmatprep.mubr.bf16.mxu0 0
        %1719 = vmatmul.mubr.bf16.gmra.mrb[0].mxu0 %v1634
        %v1720 = vpop.f32.mrb[0].mxu0
        %v1721 = vadd.f32 0.0, %v1720
        %v1722 = vpop.f32.mrb[0].mxu0
        %v1723 = vpop.f32.mrb[0].mxu0
        %v1724 = vpop.f32.mrb[0].mxu0
        %1725 = vdwg.mxu0
        %v1726 = vadd.f32 %v1574, %v1680
        %v1727 = vadd.f32 %v1576, %v1682
        %v1728 = vadd.f32 %v1615, %v1721
        %s1729 = scalar_lea.vmem %s3, 12
        %v1730 = vld [vmem:[%s1729] sm:$0xf]
        %1731 = vrot.lane.b32.xlu0 %v1411, 104
        %v1732 = vpop.permute.xlu0 %1731
        %1733 = vrot.lane.b32.xlu0 %v1412, 104
        %v1734 = vpop.permute.xlu0 %1733
        %1735 = vrot.lane.b32.xlu0 %v1413, 104
        %v1736 = vpop.permute.xlu0 %1735
        %1737 = vrot.lane.b32.xlu0 %v1417, 104
        %v1738 = vpop.permute.xlu0 %1737
        %v1739 = vsel %vm603, %v1732, %v1734
        %v1740 = vsel %vm603, %v1734, %v1736
        %v1741 = vsel %vm603, %v1736, %v1738
        %v1743 = vsel %vm1433, %v1730, 0
        %v1746 = vsel %vm215, %v1739, 0
        %v1749 = vsel %vm215, %v1740, 0
        %v1752 = vsel %vm215, %v1741, 0
        %1754 = vmatprep.subr.bf16.mxu0 %v1749
        %1755 = vmatpush1.bf16.msra.mxu0 %v1746
        %1756 = vmatprep.subr.bf16.mxu0 0
        %1757 = vmatpush1.bf16.msra.mxu0 0
        %1758 = vmatprep.subr.bf16.mxu0 0
        %1759 = vmatpush1.bf16.msra.mxu0 0
        %1760 = vmatprep.subr.bf16.mxu0 0
        %1761 = vmatpush1.bf16.msra.mxu0 0
        %1762 = vmatprep.subr.bf16.mxu0 0
        %1763 = vmatpush1.bf16.msra.mxu0 0
        %1764 = vmatprep.subr.bf16.mxu0 0
        %1765 = vmatpush1.bf16.msra.mxu0 0
        %1766 = vmatprep.subr.bf16.mxu0 0
        %1767 = vmatpush1.bf16.msra.mxu0 0
        %1768 = vmatprep.subr.bf16.mxu0 0
        %1769 = vmatpush1.bf16.msra.mxu0 0
        %1770 = vmatprep.subr.bf16.mxu0 0
        %1771 = vmatpush1.bf16.msra.mxu0 0
        %1772 = vmatprep.subr.bf16.mxu0 0
        %1773 = vmatpush1.bf16.msra.mxu0 0
        %1774 = vmatprep.subr.bf16.mxu0 0
        %1775 = vmatpush1.bf16.msra.mxu0 0
        %1776 = vmatprep.subr.bf16.mxu0 0
        %1777 = vmatpush1.bf16.msra.mxu0 0
        %1778 = vmatprep.subr.bf16.mxu0 0
        %1779 = vmatpush1.bf16.msra.mxu0 0
        %1780 = vmatprep.subr.bf16.mxu0 0
        %1781 = vmatpush1.bf16.msra.mxu0 0
        %1782 = vmatprep.subr.bf16.mxu0 0
        %1783 = vmatpush1.bf16.msra.mxu0 0
        %1784 = vmatprep.subr.bf16.mxu0 0
        %1785 = vmatpush1.bf16.msra.mxu0 0
        %1786 = vmatprep.mubr.bf16.mxu0 0
        %1787 = vmatmul.mubr.bf16.gmra.mrb[0].mxu0 %v1743
        %v1788 = vpop.f32.mrb[0].mxu0
        %v1789 = vadd.f32 0.0, %v1788
        %v1790 = vpop.f32.mrb[0].mxu0
        %v1791 = vadd.f32 0.0, %v1790
        %v1792 = vpop.f32.mrb[0].mxu0
        %v1793 = vpop.f32.mrb[0].mxu0
        %1794 = vdwg.mxu0
        %1795 = vmatprep.subr.bf16.mxu0 0
        %1796 = vmatpush1.bf16.msra.mxu0 %v1752
        %1797 = vmatprep.subr.bf16.mxu0 0
        %1798 = vmatpush1.bf16.msra.mxu0 0
        %1799 = vmatprep.subr.bf16.mxu0 0
        %1800 = vmatpush1.bf16.msra.mxu0 0
        %1801 = vmatprep.subr.bf16.mxu0 0
        %1802 = vmatpush1.bf16.msra.mxu0 0
        %1803 = vmatprep.subr.bf16.mxu0 0
        %1804 = vmatpush1.bf16.msra.mxu0 0
        %1805 = vmatprep.subr.bf16.mxu0 0
        %1806 = vmatpush1.bf16.msra.mxu0 0
        %1807 = vmatprep.subr.bf16.mxu0 0
        %1808 = vmatpush1.bf16.msra.mxu0 0
        %1809 = vmatprep.subr.bf16.mxu0 0
        %1810 = vmatpush1.bf16.msra.mxu0 0
        %1811 = vmatprep.subr.bf16.mxu0 0
        %1812 = vmatpush1.bf16.msra.mxu0 0
        %1813 = vmatprep.subr.bf16.mxu0 0
        %1814 = vmatpush1.bf16.msra.mxu0 0
        %1815 = vmatprep.subr.bf16.mxu0 0
        %1816 = vmatpush1.bf16.msra.mxu0 0
        %1817 = vmatprep.subr.bf16.mxu0 0
        %1818 = vmatpush1.bf16.msra.mxu0 0
        %1819 = vmatprep.subr.bf16.mxu0 0
        %1820 = vmatpush1.bf16.msra.mxu0 0
        %1821 = vmatprep.subr.bf16.mxu0 0
        %1822 = vmatpush1.bf16.msra.mxu0 0
        %1823 = vmatprep.subr.bf16.mxu0 0
        %1824 = vmatpush1.bf16.msra.mxu0 0
        %1825 = vmatprep.subr.bf16.mxu0 0
        %1826 = vmatpush1.bf16.msra.mxu0 0
        %1827 = vmatprep.mubr.bf16.mxu0 0
        %1828 = vmatmul.mubr.bf16.gmra.mrb[0].mxu0 %v1743
        %v1829 = vpop.f32.mrb[0].mxu0
        %v1830 = vadd.f32 0.0, %v1829
        %v1831 = vpop.f32.mrb[0].mxu0
        %v1832 = vpop.f32.mrb[0].mxu0
        %v1833 = vpop.f32.mrb[0].mxu0
        %1834 = vdwg.mxu0
        %v1835 = vadd.f32 %v1726, %v1789
        %v1836 = vadd.f32 %v1727, %v1791
        %v1837 = vadd.f32 %v1728, %v1830
        %s1838 = scalar_lea.vmem %s3, 16
        %v1839 = vld [vmem:[%s1838] sm:$0xf]
        %1840 = vrot.lane.b32.xlu0 %v1411, 103
        %v1841 = vpop.permute.xlu0 %1840
        %1842 = vrot.lane.b32.xlu0 %v1412, 103
        %v1843 = vpop.permute.xlu0 %1842
        %1844 = vrot.lane.b32.xlu0 %v1413, 103
        %v1845 = vpop.permute.xlu0 %1844
        %1846 = vrot.lane.b32.xlu0 %v1417, 103
        %v1847 = vpop.permute.xlu0 %1846
        %v1848 = vsel %vm729, %v1841, %v1843
        %v1849 = vsel %vm729, %v1843, %v1845
        %v1850 = vsel %vm729, %v1845, %v1847
        %v1852 = vsel %vm1433, %v1839, 0
        %v1855 = vsel %vm215, %v1848, 0
        %v1858 = vsel %vm215, %v1849, 0
        %v1861 = vsel %vm215, %v1850, 0
        %1863 = vmatprep.subr.bf16.mxu0 %v1858
        %1864 = vmatpush1.bf16.msra.mxu0 %v1855
        %1865 = vmatprep.subr.bf16.mxu0 0
        %1866 = vmatpush1.bf16.msra.mxu0 0
        %1867 = vmatprep.subr.bf16.mxu0 0
        %1868 = vmatpush1.bf16.msra.mxu0 0
        %1869 = vmatprep.subr.bf16.mxu0 0
        %1870 = vmatpush1.bf16.msra.mxu0 0
        %1871 = vmatprep.subr.bf16.mxu0 0
        %1872 = vmatpush1.bf16.msra.mxu0 0
        %1873 = vmatprep.subr.bf16.mxu0 0
        %1874 = vmatpush1.bf16.msra.mxu0 0
        %1875 = vmatprep.subr.bf16.mxu0 0
        %1876 = vmatpush1.bf16.msra.mxu0 0
        %1877 = vmatprep.subr.bf16.mxu0 0
        %1878 = vmatpush1.bf16.msra.mxu0 0
        %1879 = vmatprep.subr.bf16.mxu0 0
        %1880 = vmatpush1.bf16.msra.mxu0 0
        %1881 = vmatprep.subr.bf16.mxu0 0
        %1882 = vmatpush1.bf16.msra.mxu0 0
        %1883 = vmatprep.subr.bf16.mxu0 0
        %1884 = vmatpush1.bf16.msra.mxu0 0
        %1885 = vmatprep.subr.bf16.mxu0 0
        %1886 = vmatpush1.bf16.msra.mxu0 0
        %1887 = vmatprep.subr.bf16.mxu0 0
        %1888 = vmatpush1.bf16.msra.mxu0 0
        %1889 = vmatprep.subr.bf16.mxu0 0
        %1890 = vmatpush1.bf16.msra.mxu0 0
        %1891 = vmatprep.subr.bf16.mxu0 0
        %1892 = vmatpush1.bf16.msra.mxu0 0
        %1893 = vmatprep.subr.bf16.mxu0 0
        %1894 = vmatpush1.bf16.msra.mxu0 0
        %1895 = vmatprep.mubr.bf16.mxu0 0
        %1896 = vmatmul.mubr.bf16.gmra.mrb[0].mxu0 %v1852
        %v1897 = vpop.f32.mrb[0].mxu0
        %v1898 = vadd.f32 0.0, %v1897
        %v1899 = vpop.f32.mrb[0].mxu0
        %v1900 = vadd.f32 0.0, %v1899
        %v1901 = vpop.f32.mrb[0].mxu0
        %v1902 = vpop.f32.mrb[0].mxu0
        %1903 = vdwg.mxu0
        %1904 = vmatprep.subr.bf16.mxu0 0
        %1905 = vmatpush1.bf16.msra.mxu0 %v1861
        %1906 = vmatprep.subr.bf16.mxu0 0
        %1907 = vmatpush1.bf16.msra.mxu0 0
        %1908 = vmatprep.subr.bf16.mxu0 0
        %1909 = vmatpush1.bf16.msra.mxu0 0
        %1910 = vmatprep.subr.bf16.mxu0 0
        %1911 = vmatpush1.bf16.msra.mxu0 0
        %1912 = vmatprep.subr.bf16.mxu0 0
        %1913 = vmatpush1.bf16.msra.mxu0 0
        %1914 = vmatprep.subr.bf16.mxu0 0
        %1915 = vmatpush1.bf16.msra.mxu0 0
        %1916 = vmatprep.subr.bf16.mxu0 0
        %1917 = vmatpush1.bf16.msra.mxu0 0
        %1918 = vmatprep.subr.bf16.mxu0 0
        %1919 = vmatpush1.bf16.msra.mxu0 0
        %1920 = vmatprep.subr.bf16.mxu0 0
        %1921 = vmatpush1.bf16.msra.mxu0 0
        %1922 = vmatprep.subr.bf16.mxu0 0
        %1923 = vmatpush1.bf16.msra.mxu0 0
        %1924 = vmatprep.subr.bf16.mxu0 0
        %1925 = vmatpush1.bf16.msra.mxu0 0
        %1926 = vmatprep.subr.bf16.mxu0 0
        %1927 = vmatpush1.bf16.msra.mxu0 0
        %1928 = vmatprep.subr.bf16.mxu0 0
        %1929 = vmatpush1.bf16.msra.mxu0 0
        %1930 = vmatprep.subr.bf16.mxu0 0
        %1931 = vmatpush1.bf16.msra.mxu0 0
        %1932 = vmatprep.subr.bf16.mxu0 0
        %1933 = vmatpush1.bf16.msra.mxu0 0
        %1934 = vmatprep.subr.bf16.mxu0 0
        %1935 = vmatpush1.bf16.msra.mxu0 0
        %1936 = vmatprep.mubr.bf16.mxu0 0
        %1937 = vmatmul.mubr.bf16.gmra.mrb[0].mxu0 %v1852
        %v1938 = vpop.f32.mrb[0].mxu0
        %v1939 = vadd.f32 0.0, %v1938
        %v1940 = vpop.f32.mrb[0].mxu0
        %v1941 = vpop.f32.mrb[0].mxu0
        %v1942 = vpop.f32.mrb[0].mxu0
        %1943 = vdwg.mxu0
        %v1944 = vadd.f32 %v1835, %v1898
        %v1945 = vadd.f32 %v1836, %v1900
        %v1946 = vadd.f32 %v1837, %v1939
        %s1947 = scalar_lea.vmem %s3, 20
        %v1948 = vld [vmem:[%s1947] sm:$0xf]
        %1949 = vrot.lane.b32.xlu0 %v1411, 102
        %v1950 = vpop.permute.xlu0 %1949
        %1951 = vrot.lane.b32.xlu0 %v1412, 102
        %v1952 = vpop.permute.xlu0 %1951
        %1953 = vrot.lane.b32.xlu0 %v1413, 102
        %v1954 = vpop.permute.xlu0 %1953
        %1955 = vrot.lane.b32.xlu0 %v1417, 102
        %v1956 = vpop.permute.xlu0 %1955
        %v1957 = vsel %vm855, %v1950, %v1952
        %v1958 = vsel %vm855, %v1952, %v1954
        %v1959 = vsel %vm855, %v1954, %v1956
        %v1961 = vsel %vm1433, %v1948, 0
        %v1964 = vsel %vm215, %v1957, 0
        %v1967 = vsel %vm215, %v1958, 0
        %v1970 = vsel %vm215, %v1959, 0
        %1972 = vmatprep.subr.bf16.mxu0 %v1967
        %1973 = vmatpush1.bf16.msra.mxu0 %v1964
        %1974 = vmatprep.subr.bf16.mxu0 0
        %1975 = vmatpush1.bf16.msra.mxu0 0
        %1976 = vmatprep.subr.bf16.mxu0 0
        %1977 = vmatpush1.bf16.msra.mxu0 0
        %1978 = vmatprep.subr.bf16.mxu0 0
        %1979 = vmatpush1.bf16.msra.mxu0 0
        %1980 = vmatprep.subr.bf16.mxu0 0
        %1981 = vmatpush1.bf16.msra.mxu0 0
        %1982 = vmatprep.subr.bf16.mxu0 0
        %1983 = vmatpush1.bf16.msra.mxu0 0
        %1984 = vmatprep.subr.bf16.mxu0 0
        %1985 = vmatpush1.bf16.msra.mxu0 0
        %1986 = vmatprep.subr.bf16.mxu0 0
        %1987 = vmatpush1.bf16.msra.mxu0 0
        %1988 = vmatprep.subr.bf16.mxu0 0
        %1989 = vmatpush1.bf16.msra.mxu0 0
        %1990 = vmatprep.subr.bf16.mxu0 0
        %1991 = vmatpush1.bf16.msra.mxu0 0
        %1992 = vmatprep.subr.bf16.mxu0 0
        %1993 = vmatpush1.bf16.msra.mxu0 0
        %1994 = vmatprep.subr.bf16.mxu0 0
        %1995 = vmatpush1.bf16.msra.mxu0 0
        %1996 = vmatprep.subr.bf16.mxu0 0
        %1997 = vmatpush1.bf16.msra.mxu0 0
        %1998 = vmatprep.subr.bf16.mxu0 0
        %1999 = vmatpush1.bf16.msra.mxu0 0
        %2000 = vmatprep.subr.bf16.mxu0 0
        %2001 = vmatpush1.bf16.msra.mxu0 0
        %2002 = vmatprep.subr.bf16.mxu0 0
        %2003 = vmatpush1.bf16.msra.mxu0 0
        %2004 = vmatprep.mubr.bf16.mxu0 0
        %2005 = vmatmul.mubr.bf16.gmra.mrb[0].mxu0 %v1961
        %v2006 = vpop.f32.mrb[0].mxu0
        %v2007 = vadd.f32 0.0, %v2006
        %v2008 = vpop.f32.mrb[0].mxu0
        %v2009 = vadd.f32 0.0, %v2008
        %v2010 = vpop.f32.mrb[0].mxu0
        %v2011 = vpop.f32.mrb[0].mxu0
        %2012 = vdwg.mxu0
        %2013 = vmatprep.subr.bf16.mxu0 0
        %2014 = vmatpush1.bf16.msra.mxu0 %v1970
        %2015 = vmatprep.subr.bf16.mxu0 0
        %2016 = vmatpush1.bf16.msra.mxu0 0
        %2017 = vmatprep.subr.bf16.mxu0 0
        %2018 = vmatpush1.bf16.msra.mxu0 0
        %2019 = vmatprep.subr.bf16.mxu0 0
        %2020 = vmatpush1.bf16.msra.mxu0 0
        %2021 = vmatprep.subr.bf16.mxu0 0
        %2022 = vmatpush1.bf16.msra.mxu0 0
        %2023 = vmatprep.subr.bf16.mxu0 0
        %2024 = vmatpush1.bf16.msra.mxu0 0
        %2025 = vmatprep.subr.bf16.mxu0 0
        %2026 = vmatpush1.bf16.msra.mxu0 0
        %2027 = vmatprep.subr.bf16.mxu0 0
        %2028 = vmatpush1.bf16.msra.mxu0 0
        %2029 = vmatprep.subr.bf16.mxu0 0
        %2030 = vmatpush1.bf16.msra.mxu0 0
        %2031 = vmatprep.subr.bf16.mxu0 0
        %2032 = vmatpush1.bf16.msra.mxu0 0
        %2033 = vmatprep.subr.bf16.mxu0 0
        %2034 = vmatpush1.bf16.msra.mxu0 0
        %2035 = vmatprep.subr.bf16.mxu0 0
        %2036 = vmatpush1.bf16.msra.mxu0 0
        %2037 = vmatprep.subr.bf16.mxu0 0
        %2038 = vmatpush1.bf16.msra.mxu0 0
        %2039 = vmatprep.subr.bf16.mxu0 0
        %2040 = vmatpush1.bf16.msra.mxu0 0
        %2041 = vmatprep.subr.bf16.mxu0 0
        %2042 = vmatpush1.bf16.msra.mxu0 0
        %2043 = vmatprep.subr.bf16.mxu0 0
        %2044 = vmatpush1.bf16.msra.mxu0 0
        %2045 = vmatprep.mubr.bf16.mxu0 0
        %2046 = vmatmul.mubr.bf16.gmra.mrb[0].mxu0 %v1961
        %v2047 = vpop.f32.mrb[0].mxu0
        %v2048 = vadd.f32 0.0, %v2047
        %v2049 = vpop.f32.mrb[0].mxu0
        %v2050 = vpop.f32.mrb[0].mxu0
        %v2051 = vpop.f32.mrb[0].mxu0
        %2052 = vdwg.mxu0
        %v2053 = vadd.f32 %v1944, %v2007
        %v2054 = vadd.f32 %v1945, %v2009
        %v2055 = vadd.f32 %v1946, %v2048
        %s2056 = scalar_lea.vmem %s3, 24
        %v2057 = vld [vmem:[%s2056] sm:$0xf]
        %2058 = vrot.lane.b32.xlu0 %v1411, 80
        %v2059 = vpop.permute.xlu0 %2058
        %2060 = vrot.lane.b32.xlu0 %v1412, 80
        %v2061 = vpop.permute.xlu0 %2060
        %2062 = vrot.lane.b32.xlu0 %v1413, 80
        %v2063 = vpop.permute.xlu0 %2062
        %2064 = vrot.lane.b32.xlu0 %v1417, 80
        %v2065 = vpop.permute.xlu0 %2064
        %v2066 = vsel %vm981, %v2059, %v2061
        %v2067 = vsel %vm981, %v2061, %v2063
        %v2068 = vsel %vm981, %v2063, %v2065
        %v2070 = vsel %vm1433, %v2057, 0
        %v2073 = vsel %vm215, %v2066, 0
        %v2076 = vsel %vm215, %v2067, 0
        %v2079 = vsel %vm215, %v2068, 0
        %2081 = vmatprep.subr.bf16.mxu0 %v2076
        %2082 = vmatpush1.bf16.msra.mxu0 %v2073
        %2083 = vmatprep.subr.bf16.mxu0 0
        %2084 = vmatpush1.bf16.msra.mxu0 0
        %2085 = vmatprep.subr.bf16.mxu0 0
        %2086 = vmatpush1.bf16.msra.mxu0 0
        %2087 = vmatprep.subr.bf16.mxu0 0
        %2088 = vmatpush1.bf16.msra.mxu0 0
        %2089 = vmatprep.subr.bf16.mxu0 0
        %2090 = vmatpush1.bf16.msra.mxu0 0
        %2091 = vmatprep.subr.bf16.mxu0 0
        %2092 = vmatpush1.bf16.msra.mxu0 0
        %2093 = vmatprep.subr.bf16.mxu0 0
        %2094 = vmatpush1.bf16.msra.mxu0 0
        %2095 = vmatprep.subr.bf16.mxu0 0
        %2096 = vmatpush1.bf16.msra.mxu0 0
        %2097 = vmatprep.subr.bf16.mxu0 0
        %2098 = vmatpush1.bf16.msra.mxu0 0
        %2099 = vmatprep.subr.bf16.mxu0 0
        %2100 = vmatpush1.bf16.msra.mxu0 0
        %2101 = vmatprep.subr.bf16.mxu0 0
        %2102 = vmatpush1.bf16.msra.mxu0 0
        %2103 = vmatprep.subr.bf16.mxu0 0
        %2104 = vmatpush1.bf16.msra.mxu0 0
        %2105 = vmatprep.subr.bf16.mxu0 0
        %2106 = vmatpush1.bf16.msra.mxu0 0
        %2107 = vmatprep.subr.bf16.mxu0 0
        %2108 = vmatpush1.bf16.msra.mxu0 0
        %2109 = vmatprep.subr.bf16.mxu0 0
        %2110 = vmatpush1.bf16.msra.mxu0 0
        %2111 = vmatprep.subr.bf16.mxu0 0
        %2112 = vmatpush1.bf16.msra.mxu0 0
        %2113 = vmatprep.mubr.bf16.mxu0 0
        %2114 = vmatmul.mubr.bf16.gmra.mrb[0].mxu0 %v2070
        %v2115 = vpop.f32.mrb[0].mxu0
        %v2116 = vadd.f32 0.0, %v2115
        %v2117 = vpop.f32.mrb[0].mxu0
        %v2118 = vadd.f32 0.0, %v2117
        %v2119 = vpop.f32.mrb[0].mxu0
        %v2120 = vpop.f32.mrb[0].mxu0
        %2121 = vdwg.mxu0
        %2122 = vmatprep.subr.bf16.mxu0 0
        %2123 = vmatpush1.bf16.msra.mxu0 %v2079
        %2124 = vmatprep.subr.bf16.mxu0 0
        %2125 = vmatpush1.bf16.msra.mxu0 0
        %2126 = vmatprep.subr.bf16.mxu0 0
        %2127 = vmatpush1.bf16.msra.mxu0 0
        %2128 = vmatprep.subr.bf16.mxu0 0
        %2129 = vmatpush1.bf16.msra.mxu0 0
        %2130 = vmatprep.subr.bf16.mxu0 0
        %2131 = vmatpush1.bf16.msra.mxu0 0
        %2132 = vmatprep.subr.bf16.mxu0 0
        %2133 = vmatpush1.bf16.msra.mxu0 0
        %2134 = vmatprep.subr.bf16.mxu0 0
        %2135 = vmatpush1.bf16.msra.mxu0 0
        %2136 = vmatprep.subr.bf16.mxu0 0
        %2137 = vmatpush1.bf16.msra.mxu0 0
        %2138 = vmatprep.subr.bf16.mxu0 0
        %2139 = vmatpush1.bf16.msra.mxu0 0
        %2140 = vmatprep.subr.bf16.mxu0 0
        %2141 = vmatpush1.bf16.msra.mxu0 0
        %2142 = vmatprep.subr.bf16.mxu0 0
        %2143 = vmatpush1.bf16.msra.mxu0 0
        %2144 = vmatprep.subr.bf16.mxu0 0
        %2145 = vmatpush1.bf16.msra.mxu0 0
        %2146 = vmatprep.subr.bf16.mxu0 0
        %2147 = vmatpush1.bf16.msra.mxu0 0
        %2148 = vmatprep.subr.bf16.mxu0 0
        %2149 = vmatpush1.bf16.msra.mxu0 0
        %2150 = vmatprep.subr.bf16.mxu0 0
        %2151 = vmatpush1.bf16.msra.mxu0 0
        %2152 = vmatprep.subr.bf16.mxu0 0
        %2153 = vmatpush1.bf16.msra.mxu0 0
        %2154 = vmatprep.mubr.bf16.mxu0 0
        %2155 = vmatmul.mubr.bf16.gmra.mrb[0].mxu0 %v2070
        %v2156 = vpop.f32.mrb[0].mxu0
        %v2157 = vadd.f32 0.0, %v2156
        %v2158 = vpop.f32.mrb[0].mxu0
        %v2159 = vpop.f32.mrb[0].mxu0
        %v2160 = vpop.f32.mrb[0].mxu0
        %2161 = vdwg.mxu0
        %v2162 = vadd.f32 %v2053, %v2116
        %v2163 = vadd.f32 %v2054, %v2118
        %v2164 = vadd.f32 %v2055, %v2157
        %s2165 = scalar_lea.vmem %s3, 28
        %v2166 = vld [vmem:[%s2165] sm:$0xf]
        %2167 = vrot.lane.b32.xlu0 %v1411, 79
        %v2168 = vpop.permute.xlu0 %2167
        %2169 = vrot.lane.b32.xlu0 %v1412, 79
        %v2170 = vpop.permute.xlu0 %2169
        %2171 = vrot.lane.b32.xlu0 %v1413, 79
        %v2172 = vpop.permute.xlu0 %2171
        %2173 = vrot.lane.b32.xlu0 %v1417, 79
        %v2174 = vpop.permute.xlu0 %2173
        %v2175 = vsel %vm1107, %v2168, %v2170
        %v2176 = vsel %vm1107, %v2170, %v2172
        %v2177 = vsel %vm1107, %v2172, %v2174
        %v2179 = vsel %vm1433, %v2166, 0
        %v2182 = vsel %vm215, %v2175, 0
        %v2185 = vsel %vm215, %v2176, 0
        %v2188 = vsel %vm215, %v2177, 0
        %2190 = vmatprep.subr.bf16.mxu0 %v2185
        %2191 = vmatpush1.bf16.msra.mxu0 %v2182
        %2192 = vmatprep.subr.bf16.mxu0 0
        %2193 = vmatpush1.bf16.msra.mxu0 0
        %2194 = vmatprep.subr.bf16.mxu0 0
        %2195 = vmatpush1.bf16.msra.mxu0 0
        %2196 = vmatprep.subr.bf16.mxu0 0
        %2197 = vmatpush1.bf16.msra.mxu0 0
        %2198 = vmatprep.subr.bf16.mxu0 0
        %2199 = vmatpush1.bf16.msra.mxu0 0
        %2200 = vmatprep.subr.bf16.mxu0 0
        %2201 = vmatpush1.bf16.msra.mxu0 0
        %2202 = vmatprep.subr.bf16.mxu0 0
        %2203 = vmatpush1.bf16.msra.mxu0 0
        %2204 = vmatprep.subr.bf16.mxu0 0
        %2205 = vmatpush1.bf16.msra.mxu0 0
        %2206 = vmatprep.subr.bf16.mxu0 0
        %2207 = vmatpush1.bf16.msra.mxu0 0
        %2208 = vmatprep.subr.bf16.mxu0 0
        %2209 = vmatpush1.bf16.msra.mxu0 0
        %2210 = vmatprep.subr.bf16.mxu0 0
        %2211 = vmatpush1.bf16.msra.mxu0 0
        %2212 = vmatprep.subr.bf16.mxu0 0
        %2213 = vmatpush1.bf16.msra.mxu0 0
        %2214 = vmatprep.subr.bf16.mxu0 0
        %2215 = vmatpush1.bf16.msra.mxu0 0
        %2216 = vmatprep.subr.bf16.mxu0 0
        %2217 = vmatpush1.bf16.msra.mxu0 0
        %2218 = vmatprep.subr.bf16.mxu0 0
        %2219 = vmatpush1.bf16.msra.mxu0 0
        %2220 = vmatprep.subr.bf16.mxu0 0
        %2221 = vmatpush1.bf16.msra.mxu0 0
        %2222 = vmatprep.mubr.bf16.mxu0 0
        %2223 = vmatmul.mubr.bf16.gmra.mrb[0].mxu0 %v2179
        %v2224 = vpop.f32.mrb[0].mxu0
        %v2225 = vadd.f32 0.0, %v2224
        %v2226 = vpop.f32.mrb[0].mxu0
        %v2227 = vadd.f32 0.0, %v2226
        %v2228 = vpop.f32.mrb[0].mxu0
        %v2229 = vpop.f32.mrb[0].mxu0
        %2230 = vdwg.mxu0
        %2231 = vmatprep.subr.bf16.mxu0 0
        %2232 = vmatpush1.bf16.msra.mxu0 %v2188
        %2233 = vmatprep.subr.bf16.mxu0 0
        %2234 = vmatpush1.bf16.msra.mxu0 0
        %2235 = vmatprep.subr.bf16.mxu0 0
        %2236 = vmatpush1.bf16.msra.mxu0 0
        %2237 = vmatprep.subr.bf16.mxu0 0
        %2238 = vmatpush1.bf16.msra.mxu0 0
        %2239 = vmatprep.subr.bf16.mxu0 0
        %2240 = vmatpush1.bf16.msra.mxu0 0
        %2241 = vmatprep.subr.bf16.mxu0 0
        %2242 = vmatpush1.bf16.msra.mxu0 0
        %2243 = vmatprep.subr.bf16.mxu0 0
        %2244 = vmatpush1.bf16.msra.mxu0 0
        %2245 = vmatprep.subr.bf16.mxu0 0
        %2246 = vmatpush1.bf16.msra.mxu0 0
        %2247 = vmatprep.subr.bf16.mxu0 0
        %2248 = vmatpush1.bf16.msra.mxu0 0
        %2249 = vmatprep.subr.bf16.mxu0 0
        %2250 = vmatpush1.bf16.msra.mxu0 0
        %2251 = vmatprep.subr.bf16.mxu0 0
        %2252 = vmatpush1.bf16.msra.mxu0 0
        %2253 = vmatprep.subr.bf16.mxu0 0
        %2254 = vmatpush1.bf16.msra.mxu0 0
        %2255 = vmatprep.subr.bf16.mxu0 0
        %2256 = vmatpush1.bf16.msra.mxu0 0
        %2257 = vmatprep.subr.bf16.mxu0 0
        %2258 = vmatpush1.bf16.msra.mxu0 0
        %2259 = vmatprep.subr.bf16.mxu0 0
        %2260 = vmatpush1.bf16.msra.mxu0 0
        %2261 = vmatprep.subr.bf16.mxu0 0
        %2262 = vmatpush1.bf16.msra.mxu0 0
        %2263 = vmatprep.mubr.bf16.mxu0 0
        %2264 = vmatmul.mubr.bf16.gmra.mrb[0].mxu0 %v2179
        %v2265 = vpop.f32.mrb[0].mxu0
        %v2266 = vadd.f32 0.0, %v2265
        %v2267 = vpop.f32.mrb[0].mxu0
        %v2268 = vpop.f32.mrb[0].mxu0
        %v2269 = vpop.f32.mrb[0].mxu0
        %2270 = vdwg.mxu0
        %v2271 = vadd.f32 %v2162, %v2225
        %v2272 = vadd.f32 %v2163, %v2227
        %v2273 = vadd.f32 %v2164, %v2266
        %s2274 = scalar_lea.vmem %s3, 32
        %v2275 = vld [vmem:[%s2274] sm:$0xf]
        %2276 = vrot.lane.b32.xlu0 %v1411, 78
        %v2277 = vpop.permute.xlu0 %2276
        %2278 = vrot.lane.b32.xlu0 %v1412, 78
        %v2279 = vpop.permute.xlu0 %2278
        %2280 = vrot.lane.b32.xlu0 %v1413, 78
        %v2281 = vpop.permute.xlu0 %2280
        %2282 = vrot.lane.b32.xlu0 %v1417, 78
        %v2283 = vpop.permute.xlu0 %2282
        %v2284 = vsel %vm1233, %v2277, %v2279
        %v2285 = vsel %vm1233, %v2279, %v2281
        %v2286 = vsel %vm1233, %v2281, %v2283
        %v2288 = vsel %vm1433, %v2275, 0
        %v2291 = vsel %vm215, %v2284, 0
        %v2294 = vsel %vm215, %v2285, 0
        %v2297 = vsel %vm215, %v2286, 0
        %2299 = vmatprep.subr.bf16.mxu0 %v2294
        %2300 = vmatpush1.bf16.msra.mxu0 %v2291
        %2301 = vmatprep.subr.bf16.mxu0 0
        %2302 = vmatpush1.bf16.msra.mxu0 0
        %2303 = vmatprep.subr.bf16.mxu0 0
        %2304 = vmatpush1.bf16.msra.mxu0 0
        %2305 = vmatprep.subr.bf16.mxu0 0
        %2306 = vmatpush1.bf16.msra.mxu0 0
        %2307 = vmatprep.subr.bf16.mxu0 0
        %2308 = vmatpush1.bf16.msra.mxu0 0
        %2309 = vmatprep.subr.bf16.mxu0 0
        %2310 = vmatpush1.bf16.msra.mxu0 0
        %2311 = vmatprep.subr.bf16.mxu0 0
        %2312 = vmatpush1.bf16.msra.mxu0 0
        %2313 = vmatprep.subr.bf16.mxu0 0
        %2314 = vmatpush1.bf16.msra.mxu0 0
        %2315 = vmatprep.subr.bf16.mxu0 0
        %2316 = vmatpush1.bf16.msra.mxu0 0
        %2317 = vmatprep.subr.bf16.mxu0 0
        %2318 = vmatpush1.bf16.msra.mxu0 0
        %2319 = vmatprep.subr.bf16.mxu0 0
        %2320 = vmatpush1.bf16.msra.mxu0 0
        %2321 = vmatprep.subr.bf16.mxu0 0
        %2322 = vmatpush1.bf16.msra.mxu0 0
        %2323 = vmatprep.subr.bf16.mxu0 0
        %2324 = vmatpush1.bf16.msra.mxu0 0
        %2325 = vmatprep.subr.bf16.mxu0 0
        %2326 = vmatpush1.bf16.msra.mxu0 0
        %2327 = vmatprep.subr.bf16.mxu0 0
        %2328 = vmatpush1.bf16.msra.mxu0 0
        %2329 = vmatprep.subr.bf16.mxu0 0
        %2330 = vmatpush1.bf16.msra.mxu0 0
        %2331 = vmatprep.mubr.bf16.mxu0 0
        %2332 = vmatmul.mubr.bf16.gmra.mrb[0].mxu0 %v2288
        %v2333 = vpop.f32.mrb[0].mxu0
        %v2334 = vadd.f32 0.0, %v2333
        %v2335 = vpop.f32.mrb[0].mxu0
        %v2336 = vadd.f32 0.0, %v2335
        %v2337 = vpop.f32.mrb[0].mxu0
        %v2338 = vpop.f32.mrb[0].mxu0
        %2339 = vdwg.mxu0
        %2340 = vmatprep.subr.bf16.mxu0 0
        %2341 = vmatpush1.bf16.msra.mxu0 %v2297
        %2342 = vmatprep.subr.bf16.mxu0 0
        %2343 = vmatpush1.bf16.msra.mxu0 0
        %2344 = vmatprep.subr.bf16.mxu0 0
        %2345 = vmatpush1.bf16.msra.mxu0 0
        %2346 = vmatprep.subr.bf16.mxu0 0
        %2347 = vmatpush1.bf16.msra.mxu0 0
        %2348 = vmatprep.subr.bf16.mxu0 0
        %2349 = vmatpush1.bf16.msra.mxu0 0
        %2350 = vmatprep.subr.bf16.mxu0 0
        %2351 = vmatpush1.bf16.msra.mxu0 0
        %2352 = vmatprep.subr.bf16.mxu0 0
        %2353 = vmatpush1.bf16.msra.mxu0 0
        %2354 = vmatprep.subr.bf16.mxu0 0
        %2355 = vmatpush1.bf16.msra.mxu0 0
        %2356 = vmatprep.subr.bf16.mxu0 0
        %2357 = vmatpush1.bf16.msra.mxu0 0
        %2358 = vmatprep.subr.bf16.mxu0 0
        %2359 = vmatpush1.bf16.msra.mxu0 0
        %2360 = vmatprep.subr.bf16.mxu0 0
        %2361 = vmatpush1.bf16.msra.mxu0 0
        %2362 = vmatprep.subr.bf16.mxu0 0
        %2363 = vmatpush1.bf16.msra.mxu0 0
        %2364 = vmatprep.subr.bf16.mxu0 0
        %2365 = vmatpush1.bf16.msra.mxu0 0
        %2366 = vmatprep.subr.bf16.mxu0 0
        %2367 = vmatpush1.bf16.msra.mxu0 0
        %2368 = vmatprep.subr.bf16.mxu0 0
        %2369 = vmatpush1.bf16.msra.mxu0 0
        %2370 = vmatprep.subr.bf16.mxu0 0
        %2371 = vmatpush1.bf16.msra.mxu0 0
        %2372 = vmatprep.mubr.bf16.mxu0 0
        %2373 = vmatmul.mubr.bf16.gmra.mrb[0].mxu0 %v2288
        %v2374 = vpop.f32.mrb[0].mxu0
        %v2375 = vadd.f32 0.0, %v2374
        %v2376 = vpop.f32.mrb[0].mxu0
        %v2377 = vpop.f32.mrb[0].mxu0
        %v2378 = vpop.f32.mrb[0].mxu0
        %2379 = vdwg.mxu0
        %v2380 = vadd.f32 %v2271, %v2334
        %v2381 = vadd.f32 %v2272, %v2336
        %v2382 = vadd.f32 %v2273, %v2375
        %v2383 = vmul.f32 %v2380, %v1337
        %v2384 = vmul.f32 %v2381, %v1341
        %v2385 = vmul.f32 %v2382, %v1345
        %v2386 = vadd.f32 %v2383, %v2384
        %v2387 = vadd.f32 %v2386, %v2385
        %2388 = vadd.xlane.f32.xlu0 %v2387
        %v2389 = vpop.xlane.xlu0 %2388
        %v2390 = vmul.f32 %v2383, %v2380
        %v2391 = vmul.f32 %v2384, %v2381
        %v2392 = vmul.f32 %v2385, %v2382
        %v2393 = vadd.f32 %v2390, %v2391
        %v2394 = vadd.f32 %v2393, %v2392
        %2395 = vadd.xlane.f32.xlu0 %v2394
        %v2396 = vpop.xlane.xlu0 %2395
        %v2397 = vmul.f32 %v2389, 0.00390625
        %v2398 = vmul.f32 %v2396, 0.00390625
        %v2399 = vmul.f32 %v2397, %v2397
        %v2400 = vsub.f32 %v2398, %v2399
        %v2401 = vmax.f32 %v2400, 0.0
        %v2402 = vsub.f32 %v2380, %v2397
        %v2403 = vsub.f32 %v2381, %v2397
        %v2404 = vsub.f32 %v2382, %v2397
        %v2405 = vadd.f32 %v2401, 1e-05
        %v2406 = vrsqrt.pop %v2405
        %v2407 = vmul.f32 %v2402, %v2406
        %v2408 = vmul.f32 %v2403, %v2406
        %v2409 = vmul.f32 %v2404, %v2406
        %v2410 = vmax.f32 %v2407, 0.0
        %v2411 = vmax.f32 %v2408, 0.0
        %v2412 = vmax.f32 %v2409, 0.0
        %v2413 = vmul.f32 %v2410, %v1337
        %v2414 = vmul.f32 %v2411, %v1341
        %v2415 = vmul.f32 %v2412, %v1345
        %2416 = vst [vmem:[%s190] sm:$0xff] %v2413
        %2417 = vst [vmem:[%s190 + $0x8] sm:$0xff] %v2414
        %2418 = vst [vmem:[%s190 + $0x10] sm:$0xff] %v2415
        %s2419 = sand.u32 %s115, 1
        %s2420 = scalar_lea.sflag [#allocation5], %s2419
        %s2421 = sand.u32 %s115, 1
        %s2422 = smul.addr %s2421, 24
        %s2423 = scalar_lea.vmem [#allocation4], %s2422
        // Predicated region
        $region37: #{tpu_custom_call.1} parent=35 // pred_check
          %p2424 = pneg %p125
        $region38: #{tpu_custom_call.1} parent=35 // pred_check_branch
          %2426 = sbr.rel (%p2424) target = $region40
        $region39: #{tpu_custom_call.1} parent=35 // pred_region
          %s2428 = ssub.s32 384, 384
          %2429 = vsyncadd %s2420, %s2428
          %s2430 = smul.addr %s18, 3
          %s2431 = smul.addr %s2430, 128
          %s2432 = scalar_lea.hbm %s4, %s2431
          %s2434 = sshll.u32 %s2423, 4
          %s2435 = int_to_ptr.vmem [resolvable:$true] %s2434
          %2437 = dma.vmem_to_hbm [thread:$0]  %s2435, 384, %s2432, %s2420
        $region40: #{tpu_custom_call.1} parent=35 // pred_fallthru
          _
      $region36: #{tpu_custom_call.1} parent=5 // pred_fallthru
        _
      %p2438 = scmp.le.s32.totalorder 2, %s13
      // Predicated region
      $region41: #{tpu_custom_call.1} parent=5 // pred_check
        %p2439 = pneg %p2438
      $region42: #{tpu_custom_call.1} parent=5 // pred_check_branch
        %2441 = sbr.rel (%p2439) target = $region44
      $region43: #{tpu_custom_call.1} parent=5 // pred_region
        %s2442 = ssub.s32 %s13, 2
        // Predicated region
        $region45: #{tpu_custom_call.1} parent=43 // pred_check
          %p2443 = pneg %p131
        $region46: #{tpu_custom_call.1} parent=43 // pred_check_branch
          %2445 = sbr.rel (%p2443) target = $region48
        $region47: #{tpu_custom_call.1} parent=43 // pred_region
          %s2446 = sand.u32 %s116, 1
          %s2447 = scalar_lea.sflag [#allocation5], %s2446
          %s2448 = sand.u32 %s116, 1
          %s2449 = smul.addr %s2448, 24
          %s2450 = scalar_lea.vmem [#allocation4], %s2449
          %2451 = dma.done %s2447, 384
        $region48: #{tpu_custom_call.1} parent=43 // pred_fallthru
          _
      $region44: #{tpu_custom_call.1} parent=5 // pred_fallthru
        _
    $region6: #{tpu_custom_call.1} parent=1 // loop_footer
      %s17 = sadd.s32 1, %s13
    $region7: #{tpu_custom_call.1} parent=1 // loop_footer_branch
      %12 = sbr.rel target = $region3
    $region8: #{tpu_custom_call.1} parent=1 // loop_exit
      _
    %2452 = vsyncpa [#allocation5], 1
    %s2453 = scalar_lea.sflag [#allocation5], 1
    %2454 = vsyncpa %s2453, 1

</llo_original>
